<compile_context>
chip_gen: v5e
topology: v5e:2x2
jax: 0.10.0
libtpu: 0.0.40
codegen_flags: <defaults>
</compile_context>

<pallas_src>
import functools

import jax
import jax.numpy as jnp
from jax import lax
from jax.experimental import pallas as pl
from jax.experimental.pallas import tpu as pltpu

LANE = 128                      # TPU lane width: last dims padded to this
_NEG_BIG = -1e30                # finite "-inf" for the masked log_softmax


def _round_up(v, m):
    return (v + m - 1) // m * m


def _vmem_limit_bytes():
    """Generation-aware VMEM budget (v7x: 64 MiB physical, v5e/v6e: 128 MiB)."""
    cap = 64 * 1024 * 1024      # conservative default = v7x per-TC physical VMEM
    try:
        get_info = getattr(pltpu, "get_tpu_info", None)
        if get_info is not None:
            cap = int(getattr(get_info(), "vmem_capacity_bytes", cap))
    except Exception:
        pass
    return (cap * 3) // 4       # leave headroom for compiler-internal scratch


def _pick_mlp_tile(n_pad):
    for t in (512, 256, 128):
        if n_pad % t == 0:
            return t
    return n_pad


def _pick_row_tile(n):
    # Larger row tiles cut the streaming path's redundant z re-reads
    # (~ n^2 * c * 4 / tm bytes per step) while keeping >= 4 row blocks so the
    # grid still pipelines and both v7x TensorCores get work.
    for t in (2048, 1024, 512, 256):
        if n >= 4 * t:
            return t
    return 128


def _masked_log_softmax(z, num_classes):
    """log_softmax over the first `num_classes` lanes, ignoring padded lanes."""
    col = lax.broadcasted_iota(jnp.int32, z.shape, 1)
    valid = col < num_classes
    zm = jnp.where(valid, z, _NEG_BIG)
    m = jnp.max(zm, axis=1, keepdims=True)
    s = zm - m
    e = jnp.where(valid, jnp.exp(s), 0.0)
    lse = jnp.log(jnp.sum(e, axis=1, keepdims=True))
    return jnp.where(valid, s - lse, 0.0)


# ---------------------------------------------------------------------------
# Kernel 1: fused MLP.  h = relu(x@W1+b1)@W2 + b2
# ---------------------------------------------------------------------------
def mlp_kernel(x_ref, w1_ref, b1_ref, w2_ref, b2_ref, h_ref):
    h1 = jnp.dot(x_ref[...], w1_ref[...], preferred_element_type=jnp.float32)
    h1 = jnp.maximum(h1 + b1_ref[...], 0.0)
    h_ref[...] = (jnp.dot(h1, w2_ref[...], preferred_element_type=jnp.float32)
                  + b2_ref[...])


# ---------------------------------------------------------------------------
# Kernel 2a: fused K-step propagation with VMEM-resident adjacency.
#   z <- adj_scaled @ z + alpha*h   (K times), then masked log_softmax.
# adj is bf16; z is cast to bf16 per step so the MXU runs its native bf16 path
# with f32 accumulation. Everything stays in VMEM: adjacency leaves HBM once.
# ---------------------------------------------------------------------------
def fused_prop_kernel(adj_ref, h_ref, out_ref, z_ref, ah_ref, *,
                      k_steps, alpha, num_classes):
    h = h_ref[...]
    z_ref[...] = h
    ah_ref[...] = alpha * h          # computed once here; never touches HBM

    if k_steps > 0:
        @pl.loop(0, k_steps)
        def _(step):
            z_b = z_ref[...].astype(jnp.bfloat16)         # bf16 MXU operand
            z_ref[...] = jnp.dot(adj_ref[...], z_b,
                                 preferred_element_type=jnp.float32) + ah_ref[...]

    out_ref[...] = _masked_log_softmax(z_ref[...], num_classes)


# ---------------------------------------------------------------------------
# Kernel 2b (fallback): one propagation step, (row x reduction) tiled.
#   out[i,:] = alpha*h[i,:] + sum_k adj[i,k] @ z[k,:]
# Accumulates directly into out_ref (output block index ignores k, so it is
# VMEM-resident across the reduction axis). bf16 x bf16 MXU, f32 accumulate.
# The final step fuses the lane-masked log_softmax.
# ---------------------------------------------------------------------------
def prop_step_kernel(adj_ref, z_ref, h_ref, out_ref, *, alpha, num_classes, finalize):
    k = pl.program_id(1)

    @pl.when(k == 0)
    def _():
        out_ref[...] = alpha * h_ref[...]

    out_ref[...] += jnp.dot(adj_ref[...], z_ref[...].astype(jnp.bfloat16),
                            preferred_element_type=jnp.float32)

    if finalize:
        @pl.when(k == pl.num_programs(1) - 1)
        def _():
            out_ref[...] = _masked_log_softmax(out_ref[...], num_classes)


# ---------------------------------------------------------------------------
# pallas_call wrappers
# ---------------------------------------------------------------------------
def _mlp(x_p, w1_p, b1_p, w2_p, b2_p, *, tile, vmem_limit):
    n_pad, f_pad = x_p.shape
    h_pad = w1_p.shape[1]
    c_pad = w2_p.shape[1]
    return pl.pallas_call(
        mlp_kernel,
        out_shape=jax.ShapeDtypeStruct((n_pad, c_pad), jnp.float32),
        grid=(n_pad // tile,),
        in_specs=[
            pl.BlockSpec((tile, f_pad), lambda i: (i, 0)),
            pl.BlockSpec((f_pad, h_pad), lambda i: (0, 0)),
            pl.BlockSpec((1, h_pad), lambda i: (0, 0)),
            pl.BlockSpec((h_pad, c_pad), lambda i: (0, 0)),
            pl.BlockSpec((1, c_pad), lambda i: (0, 0)),
        ],
        out_specs=pl.BlockSpec((tile, c_pad), lambda i: (i, 0)),
        compiler_params=pltpu.CompilerParams(
            dimension_semantics=("parallel",),
            vmem_limit_bytes=vmem_limit),
        cost_estimate=pl.CostEstimate(
            flops=2 * n_pad * f_pad * h_pad + 2 * n_pad * h_pad * c_pad,
            transcendentals=0,
            bytes_accessed=(n_pad * f_pad + f_pad * h_pad + h_pad
                            + h_pad * c_pad + c_pad + n_pad * c_pad) * 4),
    )(x_p, w1_p, b1_p, w2_p, b2_p)


def _prop_fused(adj_p, h, *, k_steps, alpha, num_classes, vmem_limit):
    n_pad, c_pad = h.shape
    kernel = functools.partial(fused_prop_kernel, k_steps=k_steps, alpha=alpha,
                               num_classes=num_classes)
    vmem_spec = pl.BlockSpec(memory_space=pltpu.MemorySpace.VMEM)
    return pl.pallas_call(
        kernel,
        out_shape=jax.ShapeDtypeStruct((n_pad, c_pad), jnp.float32),
        in_specs=[vmem_spec, vmem_spec],
        out_specs=vmem_spec,
        scratch_shapes=[pltpu.VMEM((n_pad, c_pad), jnp.float32),   # z
                        pltpu.VMEM((n_pad, c_pad), jnp.float32)],  # alpha*h
        compiler_params=pltpu.CompilerParams(vmem_limit_bytes=vmem_limit),
        cost_estimate=pl.CostEstimate(
            flops=2 * k_steps * n_pad * n_pad * c_pad,
            transcendentals=n_pad * c_pad,
            bytes_accessed=n_pad * n_pad * 2 + 2 * n_pad * c_pad * 4),
    )(adj_p, h)


def _prop_step(adj_p, z, h, *, alpha, num_classes, finalize, tm, tk, vmem_limit):
    n_pad, c_pad = z.shape
    kernel = functools.partial(prop_step_kernel, alpha=alpha,
                               num_classes=num_classes, finalize=finalize)
    # TODO(synk): if a trace shows exposed adjacency DMA here, add
    # pipeline_mode=pl.Buffered(3) on the adjacency BlockSpec.
    return pl.pallas_call(
        kernel,
        out_shape=jax.ShapeDtypeStruct((n_pad, c_pad), jnp.float32),
        grid=(n_pad // tm, n_pad // tk),      # rows parallel, reduction last
        in_specs=[
            pl.BlockSpec((tm, tk), lambda i, k: (i, k)),      # adjacency (bf16)
            pl.BlockSpec((tk, c_pad), lambda i, k: (k, 0)),   # z (bf16-cast in kernel)
            pl.BlockSpec((tm, c_pad), lambda i, k: (i, 0)),   # h (alpha applied at k==0)
        ],
        out_specs=pl.BlockSpec((tm, c_pad), lambda i, k: (i, 0)),
        compiler_params=pltpu.CompilerParams(
            dimension_semantics=("parallel", "arbitrary"),
            vmem_limit_bytes=vmem_limit),
        cost_estimate=pl.CostEstimate(
            flops=2 * n_pad * n_pad * c_pad,
            transcendentals=n_pad * c_pad if finalize else 0,
            bytes_accessed=n_pad * n_pad * 2 + 3 * n_pad * c_pad * 4),
    )(adj_p, z, h)


@functools.partial(jax.jit, static_argnames=("k_steps", "alpha", "force_streaming"))
def appnp_net_forward(x, adj_scaled, w1, b1, w2, b2, *, k_steps, alpha,
                      force_streaming=False):
    """adj_scaled: [n, n] bf16 = (1-alpha) * D^-1/2 (A+I) D^-1/2 (unpadded)."""
    n, f = x.shape
    h_dim, c = w1.shape[1], w2.shape[1]
    f_pad, h_pad, c_pad = (_round_up(d, LANE) for d in (f, h_dim, c))
    vmem_limit = _vmem_limit_bytes()

    # Pick the propagation strategy: fused-resident if adjacency + per-node
    # vectors fit comfortably in the generation-aware VMEM budget (2x safety
    # factor covers any internal buffering), else per-step streaming.
    n_pad_min = _round_up(n, LANE)
    resident_bytes = n_pad_min * n_pad_min * 2 + 4 * n_pad_min * c_pad * 4
    use_fused = (not force_streaming) and (2 * resident_bytes <= vmem_limit)

    if use_fused:
        n_pad, tm, tk = n_pad_min, None, None
    else:
        tm = _pick_row_tile(n)
        tk = min(tm, 512)                 # adj block tm x tk bf16 stays <= 2 MiB
        n_pad = _round_up(n, tm)

    # Lane-dense zero padding (padded rows/cols are exact zeros -> math unchanged).
    x_p = jnp.pad(x, ((0, n_pad - n), (0, f_pad - f)))
    w1_p = jnp.pad(w1, ((0, f_pad - f), (0, h_pad - h_dim)))
    b1_p = jnp.pad(b1.reshape(1, -1), ((0, 0), (0, h_pad - h_dim)))
    w2_p = jnp.pad(w2, ((0, h_pad - h_dim), (0, c_pad - c)))
    b2_p = jnp.pad(b2.reshape(1, -1), ((0, 0), (0, c_pad - c)))
    adj_p = jnp.pad(adj_scaled, ((0, n_pad - n), (0, n_pad - n)))

    # Dropout: identity at inference (training=False), intentionally omitted.
    h = _mlp(x_p, w1_p, b1_p, w2_p, b2_p,
             tile=_pick_mlp_tile(n_pad), vmem_limit=vmem_limit)

    if k_steps == 0:                      # degenerate: no propagation
        return jax.nn.log_softmax(h[:n, :c], axis=1)

    # TODO(synk): for large real (sparse) graphs replace the dense bf16 A_hat with
    # a CSR SpMV kernel (scalar-prefetched row pointers + DMA-gathered z rows).
    if use_fused:
        z = _prop_fused(adj_p, h, k_steps=k_steps, alpha=alpha,
                        num_classes=c, vmem_limit=vmem_limit)
    else:
        z = h
        for step in range(k_steps):
            z = _prop_step(adj_p, z, h, alpha=alpha, num_classes=c,
                           finalize=(step == k_steps - 1),
                           tm=tm, tk=tk, vmem_limit=vmem_limit)
    return z[:n, :c]


def build_propagation_matrix(edge_index, num_nodes, *, alpha):
    """Dense (1-alpha) * D^-1/2 (A+I) D^-1/2, stored bf16 (halves HBM traffic)."""
    src, dst = edge_index[0], edge_index[1]
    a = jnp.zeros((num_nodes, num_nodes), jnp.float32)
    a = a.at[src, dst].set(1.0)           # note: duplicate edges collapse to 1
    a = a + jnp.eye(num_nodes, dtype=jnp.float32)
    deg = jnp.sum(a, axis=1)
    d_inv_sqrt = jnp.where(deg > 0, lax.rsqrt(deg), 0.0)
    a_hat = a * d_inv_sqrt[:, None] * d_inv_sqrt[None, :]
    # TODO(synk): fp8 (e4m3) storage on v7x would halve adjacency bytes again, but
    # needs end-to-end tolerance re-validation over the K-step accumulation.
    return ((1.0 - alpha) * a_hat).astype(jnp.bfloat16)


if __name__ == "__main__":
    # Small synthetic problem consistent with the module's forward.
    N_NODES = 300     # pads to 384
    N_FEATURES = 16   # dataset.num_features
    HIDDEN = 32       # args.hidden
    N_CLASSES = 8     # dataset.num_classes
    K = 10            # args.K
    ALPHA = 0.1       # args.alpha
    # args.dropout: identity at inference (training=False), so not applied.

    key = jax.random.PRNGKey(0)
    kx, kw1, kb1, kw2, kb2 = jax.random.split(key, 5)

    x = jax.random.normal(kx, (N_NODES, N_FEATURES), jnp.float32)

    # Deterministic synthetic graph: a ring, both directions.
    idx = jnp.arange(N_NODES)
    src = jnp.concatenate([idx, (idx + 1) % N_NODES])
    dst = jnp.concatenate([(idx + 1) % N_NODES, idx])
    edge_index = jnp.stack([src, dst], axis=0)

    adj_scaled = build_propagation_matrix(edge_index, N_NODES, alpha=ALPHA)

    # nn.Linear-style init; weights stored [in, out] so kernels compute x @ W.
    lim1 = 1.0 / jnp.sqrt(jnp.float32(N_FEATURES))
    w1 = jax.random.uniform(kw1, (N_FEATURES, HIDDEN), jnp.float32, -lim1, lim1)
    b1 = jax.random.uniform(kb1, (HIDDEN,), jnp.float32, -lim1, lim1)
    lim2 = 1.0 / jnp.sqrt(jnp.float32(HIDDEN))
    w2 = jax.random.uniform(kw2, (HIDDEN, N_CLASSES), jnp.float32, -lim2, lim2)
    b2 = jax.random.uniform(kb2, (N_CLASSES,), jnp.float32, -lim2, lim2)

    # Fused-resident path (auto-selected at this size) ...
    out_fused = jax.block_until_ready(
        appnp_net_forward(x, adj_scaled, w1, b1, w2, b2, k_steps=K, alpha=ALPHA))
    # ... and the streaming fallback path, exercised explicitly for coverage.
    out_stream = jax.block_until_ready(
        appnp_net_forward(x, adj_scaled, w1, b1, w2, b2, k_steps=K, alpha=ALPHA,
                          force_streaming=True))

    # Pure-JAX full-precision reference (true module semantics, same bf16-rounded
    # (1-alpha)-folded adjacency).  The tolerance covers the intentional bf16 MXU
    # operands (adjacency and per-step z cast) accumulated over K=10 steps.
    hp = lax.Precision.HIGHEST
    adj_f32 = adj_scaled.astype(jnp.float32)
    h_ref = jnp.dot(jnp.maximum(jnp.dot(x, w1, precision=hp) + b1, 0.0),
                    w2, precision=hp) + b2
    z_ref = h_ref
    for _ in range(K):
        z_ref = jnp.dot(adj_f32, z_ref, precision=hp) + ALPHA * h_ref
    ref = jax.nn.log_softmax(z_ref, axis=1)

    assert out_fused.shape == (N_NODES, N_CLASSES)
    assert out_stream.shape == (N_NODES, N_CLASSES)
    err_fused = float(jnp.max(jnp.abs(out_fused - ref)))
    err_stream = float(jnp.max(jnp.abs(out_stream - ref)))
    assert jnp.allclose(out_fused, ref, atol=2e-2, rtol=2e-2), err_fused
    assert jnp.allclose(out_stream, ref, atol=2e-2, rtol=2e-2), err_stream

    print("KERNEL_OK")
</pallas_src>

<mosaic_0001>
module attributes {stable_mosaic.version = 11 : i64} {
  func.func @mlp_kernel(%arg0: i32, %arg1: memref<128x128xf32, #tpu.memory_space<vmem>>, %arg2: memref<128x128xf32, #tpu.memory_space<vmem>>, %arg3: memref<1x128xf32, #tpu.memory_space<vmem>>, %arg4: memref<128x128xf32, #tpu.memory_space<vmem>>, %arg5: memref<1x128xf32, #tpu.memory_space<vmem>>, %arg6: memref<128x128xf32, #tpu.memory_space<vmem>>) attributes {dimension_semantics = [#tpu.dimension_semantics<parallel>], iteration_bounds = array<i64: 3>, scalar_prefetch = 0 : i64, scratch_operands = 0 : i64, tpu.core_type = #tpu.core_type<tc>, window_params = [{transform_indices = @transform_0, window_bounds = array<i64: 128, 128>}, {pipeline_mode = #tpu.pipeline_mode<synchronous>, transform_indices = @transform_1, window_bounds = array<i64: 128, 128>}, {pipeline_mode = #tpu.pipeline_mode<synchronous>, transform_indices = @transform_2, window_bounds = array<i64: 1, 128>}, {pipeline_mode = #tpu.pipeline_mode<synchronous>, transform_indices = @transform_3, window_bounds = array<i64: 128, 128>}, {pipeline_mode = #tpu.pipeline_mode<synchronous>, transform_indices = @transform_4, window_bounds = array<i64: 1, 128>}, {transform_indices = @transform_5, window_bounds = array<i64: 128, 128>}]} {
    %c0 = arith.constant 0 : index
    %c0_0 = arith.constant 0 : index
    %0 = vector.load %arg1[%c0, %c0_0] : memref<128x128xf32, #tpu.memory_space<vmem>>, vector<128x128xf32>
    %c0_1 = arith.constant 0 : index
    %c0_2 = arith.constant 0 : index
    %1 = vector.load %arg2[%c0_1, %c0_2] : memref<128x128xf32, #tpu.memory_space<vmem>>, vector<128x128xf32>
    %cst = arith.constant dense<0.000000e+00> : vector<128x128xf32>
    %2 = tpu.matmul %0, %1, %cst {dimension_numbers = #tpu.dot_dimension_numbers<[1], [0], [0], [1], [0, 0, 1, 1], [], []>} : vector<128x128xf32>, vector<128x128xf32>, vector<128x128xf32> -> vector<128x128xf32>
    %c0_3 = arith.constant 0 : index
    %c0_4 = arith.constant 0 : index
    %3 = vector.load %arg3[%c0_3, %c0_4] : memref<1x128xf32, #tpu.memory_space<vmem>>, vector<1x128xf32>
    %4 = vector.broadcast %3 : vector<1x128xf32> to vector<128x128xf32>
    %5 = arith.addf %2, %4 : vector<128x128xf32>
    %cst_5 = arith.constant 0.000000e+00 : f32
    %6 = vector.broadcast %cst_5 : f32 to vector<128x128xf32>
    %7 = arith.maximumf %5, %6 : vector<128x128xf32>
    %c0_6 = arith.constant 0 : index
    %c0_7 = arith.constant 0 : index
    %8 = vector.load %arg4[%c0_6, %c0_7] : memref<128x128xf32, #tpu.memory_space<vmem>>, vector<128x128xf32>
    %cst_8 = arith.constant dense<0.000000e+00> : vector<128x128xf32>
    %9 = tpu.matmul %7, %8, %cst_8 {dimension_numbers = #tpu.dot_dimension_numbers<[1], [0], [0], [1], [0, 0, 1, 1], [], []>} : vector<128x128xf32>, vector<128x128xf32>, vector<128x128xf32> -> vector<128x128xf32>
    %c0_9 = arith.constant 0 : index
    %c0_10 = arith.constant 0 : index
    %10 = vector.load %arg5[%c0_9, %c0_10] : memref<1x128xf32, #tpu.memory_space<vmem>>, vector<1x128xf32>
    %11 = vector.broadcast %10 : vector<1x128xf32> to vector<128x128xf32>
    %12 = arith.addf %9, %11 : vector<128x128xf32>
    %c0_11 = arith.constant 0 : index
    %c0_12 = arith.constant 0 : index
    %13 = vector.load %arg6[%c0_11, %c0_12] : memref<128x128xf32, #tpu.memory_space<vmem>>, vector<128x128xf32>
    tpu.vector_store %arg6[%c0_11, %c0_12], %12 {strides = array<i32>} : memref<128x128xf32, #tpu.memory_space<vmem>>, vector<128x128xf32>,
    return
  }
  func.func @transform_0(%arg0: i32) -> (i32, i32) {
    %c0_i32 = arith.constant 0 : i32
    %c0_i32_0 = arith.constant 0 : i32
    return %arg0, %c0_i32 : i32, i32
  }
  func.func @transform_1(%arg0: i32) -> (i32, i32) {
    %c0_i32 = arith.constant 0 : i32
    %c0_i32_0 = arith.constant 0 : i32
    %c0_i32_1 = arith.constant 0 : i32
    return %c0_i32, %c0_i32_0 : i32, i32
  }
  func.func @transform_2(%arg0: i32) -> (i32, i32) {
    %c0_i32 = arith.constant 0 : i32
    %c0_i32_0 = arith.constant 0 : i32
    %c0_i32_1 = arith.constant 0 : i32
    return %c0_i32, %c0_i32_0 : i32, i32
  }
  func.func @transform_3(%arg0: i32) -> (i32, i32) {
    %c0_i32 = arith.constant 0 : i32
    %c0_i32_0 = arith.constant 0 : i32
    %c0_i32_1 = arith.constant 0 : i32
    return %c0_i32, %c0_i32_0 : i32, i32
  }
  func.func @transform_4(%arg0: i32) -> (i32, i32) {
    %c0_i32 = arith.constant 0 : i32
    %c0_i32_0 = arith.constant 0 : i32
    %c0_i32_1 = arith.constant 0 : i32
    return %c0_i32, %c0_i32_0 : i32, i32
  }
  func.func @transform_5(%arg0: i32) -> (i32, i32) {
    %c0_i32 = arith.constant 0 : i32
    %c0_i32_0 = arith.constant 0 : i32
    return %arg0, %c0_i32 : i32, i32
  }
}

module attributes {stable_mosaic.version = 11 : i64} {
  func.func @fused_prop_kernel(%arg0: memref<384x384xbf16, #tpu.memory_space<vmem>>, %arg1: memref<384x128xf32, #tpu.memory_space<vmem>>, %arg2: memref<384x128xf32, #tpu.memory_space<vmem>>, %arg3: memref<384x128xf32, #tpu.memory_space<vmem>>, %arg4: memref<384x128xf32, #tpu.memory_space<vmem>>) attributes {dimension_semantics = [], scalar_prefetch = 0 : i64, scratch_operands = 2 : i64, tpu.core_type = #tpu.core_type<tc>} {
    %c0 = arith.constant 0 : index
    %c0_0 = arith.constant 0 : index
    %0 = vector.load %arg1[%c0, %c0_0] : memref<384x128xf32, #tpu.memory_space<vmem>>, vector<384x128xf32>
    %c0_1 = arith.constant 0 : index
    %c0_2 = arith.constant 0 : index
    %1 = vector.load %arg3[%c0_1, %c0_2] : memref<384x128xf32, #tpu.memory_space<vmem>>, vector<384x128xf32>
    tpu.vector_store %arg3[%c0_1, %c0_2], %0 {strides = array<i32>} : memref<384x128xf32, #tpu.memory_space<vmem>>, vector<384x128xf32>,
    %cst = arith.constant 1.000000e-01 : f32
    %2 = vector.broadcast %cst : f32 to vector<384x128xf32>
    %3 = arith.mulf %2, %0 : vector<384x128xf32>
    %c0_3 = arith.constant 0 : index
    %c0_4 = arith.constant 0 : index
    %4 = vector.load %arg4[%c0_3, %c0_4] : memref<384x128xf32, #tpu.memory_space<vmem>>, vector<384x128xf32>
    tpu.vector_store %arg4[%c0_3, %c0_4], %3 {strides = array<i32>} : memref<384x128xf32, #tpu.memory_space<vmem>>, vector<384x128xf32>,
    %c0_i32 = arith.constant 0 : i32
    %c10_i32 = arith.constant 10 : i32
    %5 = arith.addi %c0_i32, %c10_i32 : i32
    %c1_i32 = arith.constant 1 : i32
    scf.for %arg5 = %c0_i32 to %5 step %c1_i32  : i32 {
      %c0_14 = arith.constant 0 : index
      %c0_15 = arith.constant 0 : index
      %27 = vector.load %arg3[%c0_14, %c0_15] : memref<384x128xf32, #tpu.memory_space<vmem>>, vector<384x128xf32>
      %28 = arith.truncf %27 : vector<384x128xf32> to vector<384x128xbf16>
      %c0_16 = arith.constant 0 : index
      %c0_17 = arith.constant 0 : index
      %29 = vector.load %arg0[%c0_16, %c0_17] : memref<384x384xbf16, #tpu.memory_space<vmem>>, vector<384x384xbf16>
      %cst_18 = arith.constant dense<0.000000e+00> : vector<384x128xf32>
      %30 = tpu.matmul %29, %28, %cst_18 {dimension_numbers = #tpu.dot_dimension_numbers<[1], [0], [0], [1], [0, 0, 1, 1], [], []>} : vector<384x384xbf16>, vector<384x128xbf16>, vector<384x128xf32> -> vector<384x128xf32>
      %c0_19 = arith.constant 0 : index
      %c0_20 = arith.constant 0 : index
      %31 = vector.load %arg4[%c0_19, %c0_20] : memref<384x128xf32, #tpu.memory_space<vmem>>, vector<384x128xf32>
      %32 = arith.addf %30, %31 : vector<384x128xf32>
      %c0_21 = arith.constant 0 : index
      %c0_22 = arith.constant 0 : index
      %33 = vector.load %arg3[%c0_21, %c0_22] : memref<384x128xf32, #tpu.memory_space<vmem>>, vector<384x128xf32>
      tpu.vector_store %arg3[%c0_21, %c0_22], %32 {strides = array<i32>} : memref<384x128xf32, #tpu.memory_space<vmem>>, vector<384x128xf32>,
    }
    %c0_5 = arith.constant 0 : index
    %c0_6 = arith.constant 0 : index
    %6 = vector.load %arg3[%c0_5, %c0_6] : memref<384x128xf32, #tpu.memory_space<vmem>>, vector<384x128xf32>
    %7 = tpu.iota {dimensions = array<i32: 1>} : vector<384x128xi32>
    %c8_i32 = arith.constant 8 : i32
    %8 = vector.broadcast %c8_i32 : i32 to vector<384x128xi32>
    %9 = arith.cmpi slt, %7, %8 : vector<384x128xi32>
    %cst_7 = arith.constant -1.000000e+30 : f32
    %10 = vector.broadcast %cst_7 : f32 to vector<384x128xf32>
    %11 = arith.select %9, %6, %10 : vector<384x128xi1>, vector<384x128xf32>
    %cst_8 = arith.constant dense<0xFF800000> : vector<384xf32>
    %12 = vector.multi_reduction <maximumf>, %11, %cst_8 [1] : vector<384x128xf32> to vector<384xf32>
    %13 = vector.shape_cast %12 : vector<384xf32> to vector<384x1xf32>
    %14 = vector.broadcast %13 : vector<384x1xf32> to vector<384x128xf32>
    %15 = arith.subf %11, %14 : vector<384x128xf32>
    %16 = math.exp %15 : vector<384x128xf32>
    %cst_9 = arith.constant 0.000000e+00 : f32
    %17 = vector.broadcast %cst_9 : f32 to vector<384x128xf32>
    %18 = arith.select %9, %16, %17 : vector<384x128xi1>, vector<384x128xf32>
    %cst_10 = arith.constant dense<0.000000e+00> : vector<384xf32>
    %19 = vector.multi_reduction <add>, %18, %cst_10 [1] : vector<384x128xf32> to vector<384xf32>
    %20 = vector.shape_cast %19 : vector<384xf32> to vector<384x1xf32>
    %21 = math.log %20 : vector<384x1xf32>
    %22 = vector.broadcast %21 : vector<384x1xf32> to vector<384x128xf32>
    %23 = arith.subf %15, %22 : vector<384x128xf32>
    %cst_11 = arith.constant 0.000000e+00 : f32
    %24 = vector.broadcast %cst_11 : f32 to vector<384x128xf32>
    %25 = arith.select %9, %23, %24 : vector<384x128xi1>, vector<384x128xf32>
    %c0_12 = arith.constant 0 : index
    %c0_13 = arith.constant 0 : index
    %26 = vector.load %arg2[%c0_12, %c0_13] : memref<384x128xf32, #tpu.memory_space<vmem>>, vector<384x128xf32>
    tpu.vector_store %arg2[%c0_12, %c0_13], %25 {strides = array<i32>} : memref<384x128xf32, #tpu.memory_space<vmem>>, vector<384x128xf32>,
    return
  }
}

</mosaic_0001>

<llo_original>
// kernel: appnp_net_forward.2
$region0: #{appnp_net_forward.2}
  #allocation0 [shape = 'u32[]', space=smem, size = 0x4, offset = 0x4, fixed_abs, tag = 'smem constant byte address 0x4 - core index']
  #allocation1 [shape = 'u32[72,128]{1,0:T(1,128)}', space=vmem, size = 0x9000, scoped, tag = 'internal scratch']
  %s0 = inlined_call_operand.vmem [shape: f32[384,128], index: 0, kind: input, shape index: {}]
  %s1 = inlined_call_operand.vmem [shape: f32[128,128], index: 1, kind: input, shape index: {}]
  %s2 = inlined_call_operand.vmem [shape: f32[1,128], index: 2, kind: input, shape index: {}]
  %s3 = inlined_call_operand.vmem [shape: f32[128,128], index: 3, kind: input, shape index: {}]
  %s4 = inlined_call_operand.vmem [shape: f32[1,128], index: 4, kind: input, shape index: {}]
  %s5 = inlined_call_operand.vmem [shape: f32[384,128], index: 5, kind: output, shape index: {}]
  %s6 = sld [smem:[#allocation0]]
  $region53: #{appnp_net_forward.2} parent=0
    _
  %s8 = ssub.s32 1, %s6
  %s9 = scalar_select 0, %s8, %s6
  loop: start=0, step=1, limit=5
  $region2: #{appnp_net_forward.2} parent=0 // loop_pre_header
    _
  $region3: #{appnp_net_forward.2} parent=0 // loop_header
    %s11 = sphi 0, %s15
    %p12 = scmp.ge.s32.totalorder %s11, 5
    %s21 = sphi 0, %s23
    %s24 = sphi 0, %s21
    %s25 = sphi 0, %s24
    %s41 = sphi 0, %s25
    %s45 = sphi 0, %s45
    %s47 = sphi 0, %s45
    %s48 = sphi 0, %s47
    %s62 = sphi 0, %s48
    %s66 = sphi 0, %s66
    %s68 = sphi 0, %s66
    %s69 = sphi 0, %s68
    %s83 = sphi 0, %s69
    %s87 = sphi 0, %s87
    %s89 = sphi 0, %s87
    %s90 = sphi 0, %s89
    %s104 = sphi 0, %s90
    %s108 = sphi 0, %s108
    %s110 = sphi 0, %s108
    %s111 = sphi 0, %s110
    %s125 = sphi 0, %s111
    %s131 = sphi 0, %s133
    %s134 = sphi 0, %s131
    %s135 = sphi 0, %s134
    %s151 = sphi 0, %s135
  $region4: #{appnp_net_forward.2} parent=0 // loop_header_branch
    %14 = sbr.rel (%p12) target = $region8
  $region5: #{appnp_net_forward.2} parent=0 // loop_body
    %s16 = ssub.s32 %s11, 1
    %s17 = ssub.s32 %s11, 2
    %s18 = sadd.s32 %s11, 1
    %s19 = ssub.s32 %s11, %s18
    %p20 = scmp.eq.s32.totalorder %s19, 0
    %s22 = sadd.s32 %s21, 1
    %s23 = scalar_select %p20, %s21, %s22
    %p26 = pneg %p20
    %p27 = scmp.eq.s32.totalorder %s11, 2
    %p28 = por %p26, %p27
    %p29 = scmp.ne.s32.totalorder %s21, %s24
    %p30 = scmp.eq.s32.totalorder %s11, 0
    %p31 = por %p29, %p30
    %p32 = scmp.ne.s32.totalorder %s21, %s24
    %p33 = scmp.eq.s32.totalorder %s16, 2
    %p34 = por %p32, %p33
    %p35 = scmp.ne.s32.totalorder %s24, %s25
    %p36 = scmp.eq.s32.totalorder %s16, 0
    %p37 = por %p35, %p36
    %p38 = scmp.ne.s32.totalorder %s24, %s25
    %p39 = scmp.eq.s32.totalorder %s17, 2
    %p40 = por %p38, %p39
    %p42 = scmp.ne.s32.totalorder %s25, %s41
    %p43 = scmp.eq.s32.totalorder %s17, 0
    %p44 = por %p42, %p43
    %s46 = sadd.s32 %s45, 1
    %p49 = scmp.eq.s32.totalorder %s11, 2
    %p50 = scmp.ne.s32.totalorder %s45, %s47
    %p51 = scmp.eq.s32.totalorder %s11, 0
    %p52 = por %p50, %p51
    %p53 = scmp.ne.s32.totalorder %s45, %s47
    %p54 = scmp.eq.s32.totalorder %s16, 2
    %p55 = por %p53, %p54
    %p56 = scmp.ne.s32.totalorder %s47, %s48
    %p57 = scmp.eq.s32.totalorder %s16, 0
    %p58 = por %p56, %p57
    %p59 = scmp.ne.s32.totalorder %s47, %s48
    %p60 = scmp.eq.s32.totalorder %s17, 2
    %p61 = por %p59, %p60
    %p63 = scmp.ne.s32.totalorder %s48, %s62
    %p64 = scmp.eq.s32.totalorder %s17, 0
    %p65 = por %p63, %p64
    %s67 = sadd.s32 %s66, 1
    %p70 = scmp.eq.s32.totalorder %s11, 2
    %p71 = scmp.ne.s32.totalorder %s66, %s68
    %p72 = scmp.eq.s32.totalorder %s11, 0
    %p73 = por %p71, %p72
    %p74 = scmp.ne.s32.totalorder %s66, %s68
    %p75 = scmp.eq.s32.totalorder %s16, 2
    %p76 = por %p74, %p75
    %p77 = scmp.ne.s32.totalorder %s68, %s69
    %p78 = scmp.eq.s32.totalorder %s16, 0
    %p79 = por %p77, %p78
    %p80 = scmp.ne.s32.totalorder %s68, %s69
    %p81 = scmp.eq.s32.totalorder %s17, 2
    %p82 = por %p80, %p81
    %p84 = scmp.ne.s32.totalorder %s69, %s83
    %p85 = scmp.eq.s32.totalorder %s17, 0
    %p86 = por %p84, %p85
    %s88 = sadd.s32 %s87, 1
    %p91 = scmp.eq.s32.totalorder %s11, 2
    %p92 = scmp.ne.s32.totalorder %s87, %s89
    %p93 = scmp.eq.s32.totalorder %s11, 0
    %p94 = por %p92, %p93
    %p95 = scmp.ne.s32.totalorder %s87, %s89
    %p96 = scmp.eq.s32.totalorder %s16, 2
    %p97 = por %p95, %p96
    %p98 = scmp.ne.s32.totalorder %s89, %s90
    %p99 = scmp.eq.s32.totalorder %s16, 0
    %p100 = por %p98, %p99
    %p101 = scmp.ne.s32.totalorder %s89, %s90
    %p102 = scmp.eq.s32.totalorder %s17, 2
    %p103 = por %p101, %p102
    %p105 = scmp.ne.s32.totalorder %s90, %s104
    %p106 = scmp.eq.s32.totalorder %s17, 0
    %p107 = por %p105, %p106
    %s109 = sadd.s32 %s108, 1
    %p112 = scmp.eq.s32.totalorder %s11, 2
    %p113 = scmp.ne.s32.totalorder %s108, %s110
    %p114 = scmp.eq.s32.totalorder %s11, 0
    %p115 = por %p113, %p114
    %p116 = scmp.ne.s32.totalorder %s108, %s110
    %p117 = scmp.eq.s32.totalorder %s16, 2
    %p118 = por %p116, %p117
    %p119 = scmp.ne.s32.totalorder %s110, %s111
    %p120 = scmp.eq.s32.totalorder %s16, 0
    %p121 = por %p119, %p120
    %p122 = scmp.ne.s32.totalorder %s110, %s111
    %p123 = scmp.eq.s32.totalorder %s17, 2
    %p124 = por %p122, %p123
    %p126 = scmp.ne.s32.totalorder %s111, %s125
    %p127 = scmp.eq.s32.totalorder %s17, 0
    %p128 = por %p126, %p127
    %s129 = ssub.s32 %s11, %s18
    %p130 = scmp.eq.s32.totalorder %s129, 0
    %s132 = sadd.s32 %s131, 1
    %s133 = scalar_select %p130, %s131, %s132
    %p136 = pneg %p130
    %p137 = scmp.eq.s32.totalorder %s11, 2
    %p138 = por %p136, %p137
    %p139 = scmp.ne.s32.totalorder %s131, %s134
    %p140 = scmp.eq.s32.totalorder %s11, 0
    %p141 = por %p139, %p140
    %p142 = scmp.ne.s32.totalorder %s131, %s134
    %p143 = scmp.eq.s32.totalorder %s16, 2
    %p144 = por %p142, %p143
    %p145 = scmp.ne.s32.totalorder %s134, %s135
    %p146 = scmp.eq.s32.totalorder %s16, 0
    %p147 = por %p145, %p146
    %p148 = scmp.ne.s32.totalorder %s134, %s135
    %p149 = scmp.eq.s32.totalorder %s17, 2
    %p150 = por %p148, %p149
    %p152 = scmp.ne.s32.totalorder %s135, %s151
    %p153 = scmp.eq.s32.totalorder %s17, 0
    %p154 = por %p152, %p153
    %p155 = scmp.le.s32.totalorder 1, %s11
    %p156 = scmp.lt.s32.totalorder %s11, 4
    %p157 = pnand %p155, %p156
    %p158 = pneg %p157
    // Predicated region
    $region9: #{appnp_net_forward.2} parent=5 // pred_check
      _
    $region10: #{appnp_net_forward.2} parent=5 // pred_check_branch
      %160 = sbr.rel (%p157) target = $region12
    $region11: #{appnp_net_forward.2} parent=5 // pred_region
      %s161 = ssub.s32 %s11, 1
      // Predicated region
      $region13: #{appnp_net_forward.2} parent=11 // pred_check
        %p162 = pneg %p58
      $region14: #{appnp_net_forward.2} parent=11 // pred_check_branch
        %164 = sbr.rel (%p162) target = $region16
      $region15: #{appnp_net_forward.2} parent=11 // pred_region
        _
      $region16: #{appnp_net_forward.2} parent=11 // pred_fallthru
        _
      // Predicated region
      $region17: #{appnp_net_forward.2} parent=11 // pred_check
        %p165 = pneg %p79
      $region18: #{appnp_net_forward.2} parent=11 // pred_check_branch
        %167 = sbr.rel (%p165) target = $region20
      $region19: #{appnp_net_forward.2} parent=11 // pred_region
        _
      $region20: #{appnp_net_forward.2} parent=11 // pred_fallthru
        _
      // Predicated region
      $region21: #{appnp_net_forward.2} parent=11 // pred_check
        %p168 = pneg %p100
      $region22: #{appnp_net_forward.2} parent=11 // pred_check_branch
        %170 = sbr.rel (%p168) target = $region24
      $region23: #{appnp_net_forward.2} parent=11 // pred_region
        _
      $region24: #{appnp_net_forward.2} parent=11 // pred_fallthru
        _
      // Predicated region
      $region25: #{appnp_net_forward.2} parent=11 // pred_check
        %p171 = pneg %p121
      $region26: #{appnp_net_forward.2} parent=11 // pred_check_branch
        %173 = sbr.rel (%p171) target = $region28
      $region27: #{appnp_net_forward.2} parent=11 // pred_region
        _
      $region28: #{appnp_net_forward.2} parent=11 // pred_fallthru
        _
    $region12: #{appnp_net_forward.2} parent=5 // pred_fallthru
      _
    %p174 = scmp.lt.s32.totalorder %s11, 3
    // Predicated region
    $region29: #{appnp_net_forward.2} parent=5 // pred_check
      %p175 = pneg %p174
    $region30: #{appnp_net_forward.2} parent=5 // pred_check_branch
      %177 = sbr.rel (%p175) target = $region32
    $region31: #{appnp_net_forward.2} parent=5 // pred_region
      // Predicated region
      $region33: #{appnp_net_forward.2} parent=31 // pred_check
        %p178 = pneg %p31
      $region34: #{appnp_net_forward.2} parent=31 // pred_check_branch
        %180 = sbr.rel (%p178) target = $region36
      $region35: #{appnp_net_forward.2} parent=31 // pred_region
        %s181 = smul.u32 16, %s11
        %p182 = scmp.lt.s32.totalorder %s181, 47
        %s183 = scalar_select %p182, %s181, 47
        %s184 = smul.addr %s183, 8
        %s185 = scalar_lea.vmem %s0, %s184
        %s186 = smul.u32 16, %s11
      $region36: #{appnp_net_forward.2} parent=31 // pred_fallthru
        _
    $region32: #{appnp_net_forward.2} parent=5 // pred_fallthru
      _
    %p187 = scmp.le.s32.totalorder 1, %s11
    %p188 = scmp.lt.s32.totalorder %s11, 4
    %p189 = pnand %p187, %p188
    %p190 = pneg %p189
    // Predicated region
    $region37: #{appnp_net_forward.2} parent=5 // pred_check
      _
    $region38: #{appnp_net_forward.2} parent=5 // pred_check_branch
      %192 = sbr.rel (%p189) target = $region40
    $region39: #{appnp_net_forward.2} parent=5 // pred_region
      %s193 = ssub.s32 %s11, 1
      %s194 = smul.u32 16, %s16
      %p195 = scmp.lt.s32.totalorder %s194, 47
      %s196 = scalar_select %p195, %s194, 47
      %s197 = smul.addr %s196, 8
      %s198 = scalar_lea.vmem %s0, %s197
      %p199 = pneg %p37
      %p200 = pneg %p34
      %p201 = pneg %p58
      %p202 = pneg %p55
      %p203 = pneg %p79
      %p204 = pneg %p76
      %p205 = pneg %p100
      %p206 = pneg %p97
      %p207 = pneg %p121
      %p208 = pneg %p118
      %p209 = pneg %p147
      %p210 = pneg %p144
      %s211 = smul.u32 16, %s16
      %p212 = scmp.lt.s32.totalorder %s211, 47
      %s213 = scalar_select %p212, %s211, 47
      %s214 = smul.addr %s213, 8
      %s215 = scalar_lea.vmem %s5, %s214
      %s216 = smul.u32 16, %s16
      %p217 = scmp.lt.s32.totalorder %s216, 47
      %s218 = scalar_select %p217, %s216, 47
      %s219 = smul.addr %s218, 8
      %s220 = scalar_lea.vmem %s0, %s219
      %s221 = smul.u32 16, %s16
      %s222 = smul.u32 16, %s16
      %p223 = scmp.lt.s32.totalorder %s222, 47
      %s224 = scalar_select %p223, %s222, 47
      %s225 = smul.addr %s224, 8
      %s226 = scalar_lea.vmem %s5, %s225
      %s227 = smul.u32 16, %s16
      %v228 = vld [vmem:[%s220] sm:$0xff]
      %v229 = vld [vmem:[%s220 + $0x8] sm:$0xff]
      %v230 = vld [vmem:[%s220 + $0x10] sm:$0xff]
      %v231 = vld [vmem:[%s220 + $0x18] sm:$0xff]
      %v232 = vld [vmem:[%s220 + $0x20] sm:$0xff]
      %v233 = vld [vmem:[%s220 + $0x28] sm:$0xff]
      %v234 = vld [vmem:[%s220 + $0x30] sm:$0xff]
      %v235 = vld [vmem:[%s220 + $0x38] sm:$0xff]
      %v236 = vld [vmem:[%s220 + $0x40] sm:$0xff]
      %v237 = vld [vmem:[%s220 + $0x48] sm:$0xff]
      %v238 = vld [vmem:[%s220 + $0x50] sm:$0xff]
      %v239 = vld [vmem:[%s220 + $0x58] sm:$0xff]
      %v240 = vld [vmem:[%s220 + $0x60] sm:$0xff]
      %v241 = vld [vmem:[%s220 + $0x68] sm:$0xff]
      %v242 = vld [vmem:[%s220 + $0x70] sm:$0xff]
      %v243 = vld [vmem:[%s220 + $0x78] sm:$0xff]
      %v244 = vld [vmem:[%s1] sm:$0xff]
      %v245 = vld [vmem:[%s1 + $0x8] sm:$0xff]
      %v246 = vld [vmem:[%s1 + $0x10] sm:$0xff]
      %v247 = vld [vmem:[%s1 + $0x18] sm:$0xff]
      %v248 = vld [vmem:[%s1 + $0x20] sm:$0xff]
      %v249 = vld [vmem:[%s1 + $0x28] sm:$0xff]
      %v250 = vld [vmem:[%s1 + $0x30] sm:$0xff]
      %v251 = vld [vmem:[%s1 + $0x38] sm:$0xff]
      %v252 = vld [vmem:[%s1 + $0x40] sm:$0xff]
      %v253 = vld [vmem:[%s1 + $0x48] sm:$0xff]
      %v254 = vld [vmem:[%s1 + $0x50] sm:$0xff]
      %v255 = vld [vmem:[%s1 + $0x58] sm:$0xff]
      %v256 = vld [vmem:[%s1 + $0x60] sm:$0xff]
      %v257 = vld [vmem:[%s1 + $0x68] sm:$0xff]
      %v258 = vld [vmem:[%s1 + $0x70] sm:$0xff]
      %v259 = vld [vmem:[%s1 + $0x78] sm:$0xff]
      %v260 = vld [vmem:[%s2] sm:$0x1]
      %v262 = vperm.slane %v260, 0
      %264 = vmatpush.msra.mxu0 %v259
      %265 = vmatpush.msra.mxu0 %v258
      %266 = vmatpush.msra.mxu0 %v257
      %267 = vmatpush.msra.mxu0 %v256
      %268 = vmatpush.msra.mxu0 %v255
      %269 = vmatpush.msra.mxu0 %v254
      %270 = vmatpush.msra.mxu0 %v253
      %271 = vmatpush.msra.mxu0 %v252
      %272 = vmatpush.msra.mxu0 %v251
      %273 = vmatpush.msra.mxu0 %v250
      %274 = vmatpush.msra.mxu0 %v249
      %275 = vmatpush.msra.mxu0 %v248
      %276 = vmatpush.msra.mxu0 %v247
      %277 = vmatpush.msra.mxu0 %v246
      %278 = vmatpush.msra.mxu0 %v245
      %279 = vmatpush.msra.mxu0 %v244
      %280 = vmatmul.f32.gmra.mxu0 %v228
      %v281 = vpop.f32.mrf.mxu0
      %v282 = vadd.f32 %v262, %v281
      %283 = vmatmul.f32.gmra.mxu0 %v229
      %v284 = vpop.f32.mrf.mxu0
      %v285 = vadd.f32 %v262, %v284
      %286 = vmatmul.f32.gmra.mxu0 %v230
      %v287 = vpop.f32.mrf.mxu0
      %v288 = vadd.f32 %v262, %v287
      %289 = vmatmul.f32.gmra.mxu0 %v231
      %v290 = vpop.f32.mrf.mxu0
      %v291 = vadd.f32 %v262, %v290
      %292 = vmatmul.f32.gmra.mxu0 %v232
      %v293 = vpop.f32.mrf.mxu0
      %v294 = vadd.f32 %v262, %v293
      %295 = vmatmul.f32.gmra.mxu0 %v233
      %v296 = vpop.f32.mrf.mxu0
      %v297 = vadd.f32 %v262, %v296
      %298 = vmatmul.f32.gmra.mxu0 %v234
      %v299 = vpop.f32.mrf.mxu0
      %v300 = vadd.f32 %v262, %v299
      %301 = vmatmul.f32.gmra.mxu0 %v235
      %v302 = vpop.f32.mrf.mxu0
      %v303 = vadd.f32 %v262, %v302
      %304 = vmatmul.f32.gmra.mxu0 %v236
      %v305 = vpop.f32.mrf.mxu0
      %v306 = vadd.f32 %v262, %v305
      %307 = vmatmul.f32.gmra.mxu0 %v237
      %v308 = vpop.f32.mrf.mxu0
      %v309 = vadd.f32 %v262, %v308
      %310 = vmatmul.f32.gmra.mxu0 %v238
      %v311 = vpop.f32.mrf.mxu0
      %v312 = vadd.f32 %v262, %v311
      %313 = vmatmul.f32.gmra.mxu0 %v239
      %v314 = vpop.f32.mrf.mxu0
      %v315 = vadd.f32 %v262, %v314
      %316 = vmatmul.f32.gmra.mxu0 %v240
      %v317 = vpop.f32.mrf.mxu0
      %v318 = vadd.f32 %v262, %v317
      %319 = vmatmul.f32.gmra.mxu0 %v241
      %v320 = vpop.f32.mrf.mxu0
      %v321 = vadd.f32 %v262, %v320
      %322 = vmatmul.f32.gmra.mxu0 %v242
      %v323 = vpop.f32.mrf.mxu0
      %v324 = vadd.f32 %v262, %v323
      %325 = vmatmul.f32.gmra.mxu0 %v243
      %v326 = vpop.f32.mrf.mxu0
      %v327 = vadd.f32 %v262, %v326
      %328 = vdwg.mxu0
      %v329 = vmax.f32 %v282, 0.0
      %v330 = vmax.f32 %v285, 0.0
      %v331 = vmax.f32 %v288, 0.0
      %v332 = vmax.f32 %v291, 0.0
      %v333 = vmax.f32 %v294, 0.0
      %v334 = vmax.f32 %v297, 0.0
      %v335 = vmax.f32 %v300, 0.0
      %v336 = vmax.f32 %v303, 0.0
      %v337 = vmax.f32 %v306, 0.0
      %v338 = vmax.f32 %v309, 0.0
      %v339 = vmax.f32 %v312, 0.0
      %v340 = vmax.f32 %v315, 0.0
      %v341 = vmax.f32 %v318, 0.0
      %v342 = vmax.f32 %v321, 0.0
      %v343 = vmax.f32 %v324, 0.0
      %v344 = vmax.f32 %v327, 0.0
      %v345 = vld [vmem:[%s3] sm:$0xff]
      %v346 = vld [vmem:[%s3 + $0x8] sm:$0xff]
      %v347 = vld [vmem:[%s3 + $0x10] sm:$0xff]
      %v348 = vld [vmem:[%s3 + $0x18] sm:$0xff]
      %v349 = vld [vmem:[%s3 + $0x20] sm:$0xff]
      %v350 = vld [vmem:[%s3 + $0x28] sm:$0xff]
      %v351 = vld [vmem:[%s3 + $0x30] sm:$0xff]
      %v352 = vld [vmem:[%s3 + $0x38] sm:$0xff]
      %v353 = vld [vmem:[%s3 + $0x40] sm:$0xff]
      %v354 = vld [vmem:[%s3 + $0x48] sm:$0xff]
      %v355 = vld [vmem:[%s3 + $0x50] sm:$0xff]
      %v356 = vld [vmem:[%s3 + $0x58] sm:$0xff]
      %v357 = vld [vmem:[%s3 + $0x60] sm:$0xff]
      %v358 = vld [vmem:[%s3 + $0x68] sm:$0xff]
      %v359 = vld [vmem:[%s3 + $0x70] sm:$0xff]
      %v360 = vld [vmem:[%s3 + $0x78] sm:$0xff]
      %v361 = vld [vmem:[%s4] sm:$0x1]
      %v363 = vperm.slane %v361, 0
      %365 = vmatpush.msra.mxu0 %v360
      %366 = vmatpush.msra.mxu0 %v359
      %367 = vmatpush.msra.mxu0 %v358
      %368 = vmatpush.msra.mxu0 %v357
      %369 = vmatpush.msra.mxu0 %v356
      %370 = vmatpush.msra.mxu0 %v355
      %371 = vmatpush.msra.mxu0 %v354
      %372 = vmatpush.msra.mxu0 %v353
      %373 = vmatpush.msra.mxu0 %v352
      %374 = vmatpush.msra.mxu0 %v351
      %375 = vmatpush.msra.mxu0 %v350
      %376 = vmatpush.msra.mxu0 %v349
      %377 = vmatpush.msra.mxu0 %v348
      %378 = vmatpush.msra.mxu0 %v347
      %379 = vmatpush.msra.mxu0 %v346
      %380 = vmatpush.msra.mxu0 %v345
      %381 = vmatmul.f32.gmra.mxu0 %v329
      %v382 = vpop.f32.mrf.mxu0
      %v383 = vadd.f32 %v363, %v382
      %384 = vmatmul.f32.gmra.mxu0 %v330
      %v385 = vpop.f32.mrf.mxu0
      %v386 = vadd.f32 %v363, %v385
      %387 = vmatmul.f32.gmra.mxu0 %v331
      %v388 = vpop.f32.mrf.mxu0
      %v389 = vadd.f32 %v363, %v388
      %390 = vmatmul.f32.gmra.mxu0 %v332
      %v391 = vpop.f32.mrf.mxu0
      %v392 = vadd.f32 %v363, %v391
      %393 = vmatmul.f32.gmra.mxu0 %v333
      %v394 = vpop.f32.mrf.mxu0
      %v395 = vadd.f32 %v363, %v394
      %396 = vmatmul.f32.gmra.mxu0 %v334
      %v397 = vpop.f32.mrf.mxu0
      %v398 = vadd.f32 %v363, %v397
      %399 = vmatmul.f32.gmra.mxu0 %v335
      %v400 = vpop.f32.mrf.mxu0
      %v401 = vadd.f32 %v363, %v400
      %402 = vmatmul.f32.gmra.mxu0 %v336
      %v403 = vpop.f32.mrf.mxu0
      %v404 = vadd.f32 %v363, %v403
      %405 = vmatmul.f32.gmra.mxu0 %v337
      %v406 = vpop.f32.mrf.mxu0
      %v407 = vadd.f32 %v363, %v406
      %408 = vmatmul.f32.gmra.mxu0 %v338
      %v409 = vpop.f32.mrf.mxu0
      %v410 = vadd.f32 %v363, %v409
      %411 = vmatmul.f32.gmra.mxu0 %v339
      %v412 = vpop.f32.mrf.mxu0
      %v413 = vadd.f32 %v363, %v412
      %414 = vmatmul.f32.gmra.mxu0 %v340
      %v415 = vpop.f32.mrf.mxu0
      %v416 = vadd.f32 %v363, %v415
      %417 = vmatmul.f32.gmra.mxu0 %v341
      %v418 = vpop.f32.mrf.mxu0
      %v419 = vadd.f32 %v363, %v418
      %420 = vmatmul.f32.gmra.mxu0 %v342
      %v421 = vpop.f32.mrf.mxu0
      %v422 = vadd.f32 %v363, %v421
      %423 = vmatmul.f32.gmra.mxu0 %v343
      %v424 = vpop.f32.mrf.mxu0
      %v425 = vadd.f32 %v363, %v424
      %426 = vmatmul.f32.gmra.mxu0 %v344
      %v427 = vpop.f32.mrf.mxu0
      %v428 = vadd.f32 %v363, %v427
      %429 = vdwg.mxu0
      %430 = vst [vmem:[%s226] sm:$0xff] %v383
      %431 = vst [vmem:[%s226 + $0x8] sm:$0xff] %v386
      %432 = vst [vmem:[%s226 + $0x10] sm:$0xff] %v389
      %433 = vst [vmem:[%s226 + $0x18] sm:$0xff] %v392
      %434 = vst [vmem:[%s226 + $0x20] sm:$0xff] %v395
      %435 = vst [vmem:[%s226 + $0x28] sm:$0xff] %v398
      %436 = vst [vmem:[%s226 + $0x30] sm:$0xff] %v401
      %437 = vst [vmem:[%s226 + $0x38] sm:$0xff] %v404
      %438 = vst [vmem:[%s226 + $0x40] sm:$0xff] %v407
      %439 = vst [vmem:[%s226 + $0x48] sm:$0xff] %v410
      %440 = vst [vmem:[%s226 + $0x50] sm:$0xff] %v413
      %441 = vst [vmem:[%s226 + $0x58] sm:$0xff] %v416
      %442 = vst [vmem:[%s226 + $0x60] sm:$0xff] %v419
      %443 = vst [vmem:[%s226 + $0x68] sm:$0xff] %v422
      %444 = vst [vmem:[%s226 + $0x70] sm:$0xff] %v425
      %445 = vst [vmem:[%s226 + $0x78] sm:$0xff] %v428
      %s446 = smul.u32 16, %s16
      %p447 = scmp.lt.s32.totalorder %s446, 47
      %s448 = scalar_select %p447, %s446, 47
      %s449 = smul.addr %s448, 8
      %s450 = scalar_lea.vmem %s5, %s449
      // Predicated region
      $region41: #{appnp_net_forward.2} parent=39 // pred_check
        %p451 = pneg %p144
      $region42: #{appnp_net_forward.2} parent=39 // pred_check_branch
        %453 = sbr.rel (%p451) target = $region44
      $region43: #{appnp_net_forward.2} parent=39 // pred_region
        %s454 = smul.u32 16, %s16
      $region44: #{appnp_net_forward.2} parent=39 // pred_fallthru
        _
    $region40: #{appnp_net_forward.2} parent=5 // pred_fallthru
      _
    %p455 = scmp.le.s32.totalorder 2, %s11
    // Predicated region
    $region45: #{appnp_net_forward.2} parent=5 // pred_check
      %p456 = pneg %p455
    $region46: #{appnp_net_forward.2} parent=5 // pred_check_branch
      %458 = sbr.rel (%p456) target = $region48
    $region47: #{appnp_net_forward.2} parent=5 // pred_region
      %s459 = ssub.s32 %s11, 2
      // Predicated region
      $region49: #{appnp_net_forward.2} parent=47 // pred_check
        %p460 = pneg %p150
      $region50: #{appnp_net_forward.2} parent=47 // pred_check_branch
        %462 = sbr.rel (%p460) target = $region52
      $region51: #{appnp_net_forward.2} parent=47 // pred_region
        %s463 = smul.u32 16, %s17
        %p464 = scmp.lt.s32.totalorder %s463, 47
        %s465 = scalar_select %p464, %s463, 47
        %s466 = smul.addr %s465, 8
        %s467 = scalar_lea.vmem %s5, %s466
      $region52: #{appnp_net_forward.2} parent=47 // pred_fallthru
        _
    $region48: #{appnp_net_forward.2} parent=5 // pred_fallthru
      _
  $region6: #{appnp_net_forward.2} parent=0 // loop_footer
    %s15 = sadd.s32 1, %s11
  $region7: #{appnp_net_forward.2} parent=0 // loop_footer_branch
    %10 = sbr.rel target = $region3
  $region8: #{appnp_net_forward.2} parent=0 // loop_exit
    _

// kernel: appnp_net_forward.3
$region0: #{appnp_net_forward.3}
  #allocation0 [shape = 'u32[]', space=smem, size = 0x4, offset = 0x4, fixed_abs, tag = 'smem constant byte address 0x4 - core index']
  #allocation1 [shape = 'u32[72,128]{1,0:T(1,128)}', space=vmem, size = 0x9000, scoped, tag = 'internal scratch']
  #allocation2 [shape = 'f32[384,128]{1,0:T(8,128)}', space=vmem, size = 0x30000, scoped, tag = 'scratch operand']
  #allocation3 [shape = 'f32[384,128]{1,0:T(8,128)}', space=vmem, size = 0x30000, scoped, tag = 'scratch operand']
  %s0 = inlined_call_operand.vmem [shape: bf16[384,384], index: 0, kind: input, shape index: {}]
  %s1 = inlined_call_operand.vmem [shape: f32[384,128], index: 1, kind: input, shape index: {}]
  %s2 = inlined_call_operand.vmem [shape: f32[384,128], index: 2, kind: output, shape index: {}]
  %s3 = sld [smem:[#allocation0]]
  $region25: #{appnp_net_forward.3} parent=0
    _
  %s5 = ssub.s32 1, %s3
  %s6 = scalar_select 0, %s5, %s3
  // Predicated region
  $region2: #{appnp_net_forward.3} parent=0 // pred_check
    _
  $region3: #{appnp_net_forward.3} parent=0 // pred_check_branch
    %8 = sbr.rel (0) target = $region5
  $region4: #{appnp_net_forward.3} parent=0 // pred_region
    _
  $region5: #{appnp_net_forward.3} parent=0 // pred_fallthru
    _
  // Predicated region
  $region6: #{appnp_net_forward.3} parent=0 // pred_check
    _
  $region7: #{appnp_net_forward.3} parent=0 // pred_check_branch
    %10 = sbr.rel (0) target = $region9
  $region8: #{appnp_net_forward.3} parent=0 // pred_region
    _
  $region9: #{appnp_net_forward.3} parent=0 // pred_fallthru
    _
  %v11 = vld [vmem:[%s1] sm:$0xff]
  %v12 = vld [vmem:[%s1 + $0x8] sm:$0xff]
  %v13 = vld [vmem:[%s1 + $0x10] sm:$0xff]
  %v14 = vld [vmem:[%s1 + $0x18] sm:$0xff]
  %v15 = vld [vmem:[%s1 + $0x20] sm:$0xff]
  %v16 = vld [vmem:[%s1 + $0x28] sm:$0xff]
  %v17 = vld [vmem:[%s1 + $0x30] sm:$0xff]
  %v18 = vld [vmem:[%s1 + $0x38] sm:$0xff]
  %v19 = vld [vmem:[%s1 + $0x40] sm:$0xff]
  %v20 = vld [vmem:[%s1 + $0x48] sm:$0xff]
  %v21 = vld [vmem:[%s1 + $0x50] sm:$0xff]
  %v22 = vld [vmem:[%s1 + $0x58] sm:$0xff]
  %v23 = vld [vmem:[%s1 + $0x60] sm:$0xff]
  %v24 = vld [vmem:[%s1 + $0x68] sm:$0xff]
  %v25 = vld [vmem:[%s1 + $0x70] sm:$0xff]
  %v26 = vld [vmem:[%s1 + $0x78] sm:$0xff]
  %v27 = vld [vmem:[%s1 + $0x80] sm:$0xff]
  %v28 = vld [vmem:[%s1 + $0x88] sm:$0xff]
  %v29 = vld [vmem:[%s1 + $0x90] sm:$0xff]
  %v30 = vld [vmem:[%s1 + $0x98] sm:$0xff]
  %v31 = vld [vmem:[%s1 + $0xa0] sm:$0xff]
  %v32 = vld [vmem:[%s1 + $0xa8] sm:$0xff]
  %v33 = vld [vmem:[%s1 + $0xb0] sm:$0xff]
  %v34 = vld [vmem:[%s1 + $0xb8] sm:$0xff]
  %v35 = vld [vmem:[%s1 + $0xc0] sm:$0xff]
  %v36 = vld [vmem:[%s1 + $0xc8] sm:$0xff]
  %v37 = vld [vmem:[%s1 + $0xd0] sm:$0xff]
  %v38 = vld [vmem:[%s1 + $0xd8] sm:$0xff]
  %v39 = vld [vmem:[%s1 + $0xe0] sm:$0xff]
  %v40 = vld [vmem:[%s1 + $0xe8] sm:$0xff]
  %v41 = vld [vmem:[%s1 + $0xf0] sm:$0xff]
  %v42 = vld [vmem:[%s1 + $0xf8] sm:$0xff]
  %v43 = vld [vmem:[%s1 + $0x100] sm:$0xff]
  %v44 = vld [vmem:[%s1 + $0x108] sm:$0xff]
  %v45 = vld [vmem:[%s1 + $0x110] sm:$0xff]
  %v46 = vld [vmem:[%s1 + $0x118] sm:$0xff]
  %v47 = vld [vmem:[%s1 + $0x120] sm:$0xff]
  %v48 = vld [vmem:[%s1 + $0x128] sm:$0xff]
  %v49 = vld [vmem:[%s1 + $0x130] sm:$0xff]
  %v50 = vld [vmem:[%s1 + $0x138] sm:$0xff]
  %v51 = vld [vmem:[%s1 + $0x140] sm:$0xff]
  %v52 = vld [vmem:[%s1 + $0x148] sm:$0xff]
  %v53 = vld [vmem:[%s1 + $0x150] sm:$0xff]
  %v54 = vld [vmem:[%s1 + $0x158] sm:$0xff]
  %v55 = vld [vmem:[%s1 + $0x160] sm:$0xff]
  %v56 = vld [vmem:[%s1 + $0x168] sm:$0xff]
  %v57 = vld [vmem:[%s1 + $0x170] sm:$0xff]
  %v58 = vld [vmem:[%s1 + $0x178] sm:$0xff]
  %59 = vst [vmem:[#allocation2] sm:$0xff] %v11
  %60 = vst [vmem:[#allocation2 + $0x8] sm:$0xff] %v12
  %61 = vst [vmem:[#allocation2 + $0x10] sm:$0xff] %v13
  %62 = vst [vmem:[#allocation2 + $0x18] sm:$0xff] %v14
  %63 = vst [vmem:[#allocation2 + $0x20] sm:$0xff] %v15
  %64 = vst [vmem:[#allocation2 + $0x28] sm:$0xff] %v16
  %65 = vst [vmem:[#allocation2 + $0x30] sm:$0xff] %v17
  %66 = vst [vmem:[#allocation2 + $0x38] sm:$0xff] %v18
  %67 = vst [vmem:[#allocation2 + $0x40] sm:$0xff] %v19
  %68 = vst [vmem:[#allocation2 + $0x48] sm:$0xff] %v20
  %69 = vst [vmem:[#allocation2 + $0x50] sm:$0xff] %v21
  %70 = vst [vmem:[#allocation2 + $0x58] sm:$0xff] %v22
  %71 = vst [vmem:[#allocation2 + $0x60] sm:$0xff] %v23
  %72 = vst [vmem:[#allocation2 + $0x68] sm:$0xff] %v24
  %73 = vst [vmem:[#allocation2 + $0x70] sm:$0xff] %v25
  %74 = vst [vmem:[#allocation2 + $0x78] sm:$0xff] %v26
  %75 = vst [vmem:[#allocation2 + $0x80] sm:$0xff] %v27
  %76 = vst [vmem:[#allocation2 + $0x88] sm:$0xff] %v28
  %77 = vst [vmem:[#allocation2 + $0x90] sm:$0xff] %v29
  %78 = vst [vmem:[#allocation2 + $0x98] sm:$0xff] %v30
  %79 = vst [vmem:[#allocation2 + $0xa0] sm:$0xff] %v31
  %80 = vst [vmem:[#allocation2 + $0xa8] sm:$0xff] %v32
  %81 = vst [vmem:[#allocation2 + $0xb0] sm:$0xff] %v33
  %82 = vst [vmem:[#allocation2 + $0xb8] sm:$0xff] %v34
  %83 = vst [vmem:[#allocation2 + $0xc0] sm:$0xff] %v35
  %84 = vst [vmem:[#allocation2 + $0xc8] sm:$0xff] %v36
  %85 = vst [vmem:[#allocation2 + $0xd0] sm:$0xff] %v37
  %86 = vst [vmem:[#allocation2 + $0xd8] sm:$0xff] %v38
  %87 = vst [vmem:[#allocation2 + $0xe0] sm:$0xff] %v39
  %88 = vst [vmem:[#allocation2 + $0xe8] sm:$0xff] %v40
  %89 = vst [vmem:[#allocation2 + $0xf0] sm:$0xff] %v41
  %90 = vst [vmem:[#allocation2 + $0xf8] sm:$0xff] %v42
  %91 = vst [vmem:[#allocation2 + $0x100] sm:$0xff] %v43
  %92 = vst [vmem:[#allocation2 + $0x108] sm:$0xff] %v44
  %93 = vst [vmem:[#allocation2 + $0x110] sm:$0xff] %v45
  %94 = vst [vmem:[#allocation2 + $0x118] sm:$0xff] %v46
  %95 = vst [vmem:[#allocation2 + $0x120] sm:$0xff] %v47
  %96 = vst [vmem:[#allocation2 + $0x128] sm:$0xff] %v48
  %97 = vst [vmem:[#allocation2 + $0x130] sm:$0xff] %v49
  %98 = vst [vmem:[#allocation2 + $0x138] sm:$0xff] %v50
  %99 = vst [vmem:[#allocation2 + $0x140] sm:$0xff] %v51
  %100 = vst [vmem:[#allocation2 + $0x148] sm:$0xff] %v52
  %101 = vst [vmem:[#allocation2 + $0x150] sm:$0xff] %v53
  %102 = vst [vmem:[#allocation2 + $0x158] sm:$0xff] %v54
  %103 = vst [vmem:[#allocation2 + $0x160] sm:$0xff] %v55
  %104 = vst [vmem:[#allocation2 + $0x168] sm:$0xff] %v56
  %105 = vst [vmem:[#allocation2 + $0x170] sm:$0xff] %v57
  %106 = vst [vmem:[#allocation2 + $0x178] sm:$0xff] %v58
  %v107 = vmul.f32 %v11, 0.1
  %v108 = vmul.f32 %v12, 0.1
  %v109 = vmul.f32 %v13, 0.1
  %v110 = vmul.f32 %v14, 0.1
  %v111 = vmul.f32 %v15, 0.1
  %v112 = vmul.f32 %v16, 0.1
  %v113 = vmul.f32 %v17, 0.1
  %v114 = vmul.f32 %v18, 0.1
  %v115 = vmul.f32 %v19, 0.1
  %v116 = vmul.f32 %v20, 0.1
  %v117 = vmul.f32 %v21, 0.1
  %v118 = vmul.f32 %v22, 0.1
  %v119 = vmul.f32 %v23, 0.1
  %v120 = vmul.f32 %v24, 0.1
  %v121 = vmul.f32 %v25, 0.1
  %v122 = vmul.f32 %v26, 0.1
  %v123 = vmul.f32 %v27, 0.1
  %v124 = vmul.f32 %v28, 0.1
  %v125 = vmul.f32 %v29, 0.1
  %v126 = vmul.f32 %v30, 0.1
  %v127 = vmul.f32 %v31, 0.1
  %v128 = vmul.f32 %v32, 0.1
  %v129 = vmul.f32 %v33, 0.1
  %v130 = vmul.f32 %v34, 0.1
  %v131 = vmul.f32 %v35, 0.1
  %v132 = vmul.f32 %v36, 0.1
  %v133 = vmul.f32 %v37, 0.1
  %v134 = vmul.f32 %v38, 0.1
  %v135 = vmul.f32 %v39, 0.1
  %v136 = vmul.f32 %v40, 0.1
  %v137 = vmul.f32 %v41, 0.1
  %v138 = vmul.f32 %v42, 0.1
  %v139 = vmul.f32 %v43, 0.1
  %v140 = vmul.f32 %v44, 0.1
  %v141 = vmul.f32 %v45, 0.1
  %v142 = vmul.f32 %v46, 0.1
  %v143 = vmul.f32 %v47, 0.1
  %v144 = vmul.f32 %v48, 0.1
  %v145 = vmul.f32 %v49, 0.1
  %v146 = vmul.f32 %v50, 0.1
  %v147 = vmul.f32 %v51, 0.1
  %v148 = vmul.f32 %v52, 0.1
  %v149 = vmul.f32 %v53, 0.1
  %v150 = vmul.f32 %v54, 0.1
  %v151 = vmul.f32 %v55, 0.1
  %v152 = vmul.f32 %v56, 0.1
  %v153 = vmul.f32 %v57, 0.1
  %v154 = vmul.f32 %v58, 0.1
  %155 = vst [vmem:[#allocation3] sm:$0xff] %v107
  %156 = vst [vmem:[#allocation3 + $0x8] sm:$0xff] %v108
  %157 = vst [vmem:[#allocation3 + $0x10] sm:$0xff] %v109
  %158 = vst [vmem:[#allocation3 + $0x18] sm:$0xff] %v110
  %159 = vst [vmem:[#allocation3 + $0x20] sm:$0xff] %v111
  %160 = vst [vmem:[#allocation3 + $0x28] sm:$0xff] %v112
  %161 = vst [vmem:[#allocation3 + $0x30] sm:$0xff] %v113
  %162 = vst [vmem:[#allocation3 + $0x38] sm:$0xff] %v114
  %163 = vst [vmem:[#allocation3 + $0x40] sm:$0xff] %v115
  %164 = vst [vmem:[#allocation3 + $0x48] sm:$0xff] %v116
  %165 = vst [vmem:[#allocation3 + $0x50] sm:$0xff] %v117
  %166 = vst [vmem:[#allocation3 + $0x58] sm:$0xff] %v118
  %167 = vst [vmem:[#allocation3 + $0x60] sm:$0xff] %v119
  %168 = vst [vmem:[#allocation3 + $0x68] sm:$0xff] %v120
  %169 = vst [vmem:[#allocation3 + $0x70] sm:$0xff] %v121
  %170 = vst [vmem:[#allocation3 + $0x78] sm:$0xff] %v122
  %171 = vst [vmem:[#allocation3 + $0x80] sm:$0xff] %v123
  %172 = vst [vmem:[#allocation3 + $0x88] sm:$0xff] %v124
  %173 = vst [vmem:[#allocation3 + $0x90] sm:$0xff] %v125
  %174 = vst [vmem:[#allocation3 + $0x98] sm:$0xff] %v126
  %175 = vst [vmem:[#allocation3 + $0xa0] sm:$0xff] %v127
  %176 = vst [vmem:[#allocation3 + $0xa8] sm:$0xff] %v128
  %177 = vst [vmem:[#allocation3 + $0xb0] sm:$0xff] %v129
  %178 = vst [vmem:[#allocation3 + $0xb8] sm:$0xff] %v130
  %179 = vst [vmem:[#allocation3 + $0xc0] sm:$0xff] %v131
  %180 = vst [vmem:[#allocation3 + $0xc8] sm:$0xff] %v132
  %181 = vst [vmem:[#allocation3 + $0xd0] sm:$0xff] %v133
  %182 = vst [vmem:[#allocation3 + $0xd8] sm:$0xff] %v134
  %183 = vst [vmem:[#allocation3 + $0xe0] sm:$0xff] %v135
  %184 = vst [vmem:[#allocation3 + $0xe8] sm:$0xff] %v136
  %185 = vst [vmem:[#allocation3 + $0xf0] sm:$0xff] %v137
  %186 = vst [vmem:[#allocation3 + $0xf8] sm:$0xff] %v138
  %187 = vst [vmem:[#allocation3 + $0x100] sm:$0xff] %v139
  %188 = vst [vmem:[#allocation3 + $0x108] sm:$0xff] %v140
  %189 = vst [vmem:[#allocation3 + $0x110] sm:$0xff] %v141
  %190 = vst [vmem:[#allocation3 + $0x118] sm:$0xff] %v142
  %191 = vst [vmem:[#allocation3 + $0x120] sm:$0xff] %v143
  %192 = vst [vmem:[#allocation3 + $0x128] sm:$0xff] %v144
  %193 = vst [vmem:[#allocation3 + $0x130] sm:$0xff] %v145
  %194 = vst [vmem:[#allocation3 + $0x138] sm:$0xff] %v146
  %195 = vst [vmem:[#allocation3 + $0x140] sm:$0xff] %v147
  %196 = vst [vmem:[#allocation3 + $0x148] sm:$0xff] %v148
  %197 = vst [vmem:[#allocation3 + $0x150] sm:$0xff] %v149
  %198 = vst [vmem:[#allocation3 + $0x158] sm:$0xff] %v150
  %199 = vst [vmem:[#allocation3 + $0x160] sm:$0xff] %v151
  %200 = vst [vmem:[#allocation3 + $0x168] sm:$0xff] %v152
  %201 = vst [vmem:[#allocation3 + $0x170] sm:$0xff] %v153
  %202 = vst [vmem:[#allocation3 + $0x178] sm:$0xff] %v154
  loop: start=0, step=1, limit=10
  $region10: #{appnp_net_forward.3} parent=0 // loop_pre_header
    _
  $region11: #{appnp_net_forward.3} parent=0 // loop_header
    %s204 = sphi 0, %s208
    %p205 = scmp.ge.s32.totalorder %s204, 10
  $region12: #{appnp_net_forward.3} parent=0 // loop_header_branch
    %207 = sbr.rel (%p205) target = $region16
  $region13: #{appnp_net_forward.3} parent=0 // loop_body
    %v209 = vld [vmem:[#allocation2] sm:$0xff]
    %v210 = vld [vmem:[#allocation2 + $0x8] sm:$0xff]
    %v211 = vld [vmem:[#allocation2 + $0x10] sm:$0xff]
    %v212 = vld [vmem:[#allocation2 + $0x18] sm:$0xff]
    %v213 = vld [vmem:[#allocation2 + $0x20] sm:$0xff]
    %v214 = vld [vmem:[#allocation2 + $0x28] sm:$0xff]
    %v215 = vld [vmem:[#allocation2 + $0x30] sm:$0xff]
    %v216 = vld [vmem:[#allocation2 + $0x38] sm:$0xff]
    %v217 = vld [vmem:[#allocation2 + $0x40] sm:$0xff]
    %v218 = vld [vmem:[#allocation2 + $0x48] sm:$0xff]
    %v219 = vld [vmem:[#allocation2 + $0x50] sm:$0xff]
    %v220 = vld [vmem:[#allocation2 + $0x58] sm:$0xff]
    %v221 = vld [vmem:[#allocation2 + $0x60] sm:$0xff]
    %v222 = vld [vmem:[#allocation2 + $0x68] sm:$0xff]
    %v223 = vld [vmem:[#allocation2 + $0x70] sm:$0xff]
    %v224 = vld [vmem:[#allocation2 + $0x78] sm:$0xff]
    %v225 = vld [vmem:[#allocation2 + $0x80] sm:$0xff]
    %v226 = vld [vmem:[#allocation2 + $0x88] sm:$0xff]
    %v227 = vld [vmem:[#allocation2 + $0x90] sm:$0xff]
    %v228 = vld [vmem:[#allocation2 + $0x98] sm:$0xff]
    %v229 = vld [vmem:[#allocation2 + $0xa0] sm:$0xff]
    %v230 = vld [vmem:[#allocation2 + $0xa8] sm:$0xff]
    %v231 = vld [vmem:[#allocation2 + $0xb0] sm:$0xff]
    %v232 = vld [vmem:[#allocation2 + $0xb8] sm:$0xff]
    %v233 = vld [vmem:[#allocation2 + $0xc0] sm:$0xff]
    %v234 = vld [vmem:[#allocation2 + $0xc8] sm:$0xff]
    %v235 = vld [vmem:[#allocation2 + $0xd0] sm:$0xff]
    %v236 = vld [vmem:[#allocation2 + $0xd8] sm:$0xff]
    %v237 = vld [vmem:[#allocation2 + $0xe0] sm:$0xff]
    %v238 = vld [vmem:[#allocation2 + $0xe8] sm:$0xff]
    %v239 = vld [vmem:[#allocation2 + $0xf0] sm:$0xff]
    %v240 = vld [vmem:[#allocation2 + $0xf8] sm:$0xff]
    %v241 = vld [vmem:[#allocation2 + $0x100] sm:$0xff]
    %v242 = vld [vmem:[#allocation2 + $0x108] sm:$0xff]
    %v243 = vld [vmem:[#allocation2 + $0x110] sm:$0xff]
    %v244 = vld [vmem:[#allocation2 + $0x118] sm:$0xff]
    %v245 = vld [vmem:[#allocation2 + $0x120] sm:$0xff]
    %v246 = vld [vmem:[#allocation2 + $0x128] sm:$0xff]
    %v247 = vld [vmem:[#allocation2 + $0x130] sm:$0xff]
    %v248 = vld [vmem:[#allocation2 + $0x138] sm:$0xff]
    %v249 = vld [vmem:[#allocation2 + $0x140] sm:$0xff]
    %v250 = vld [vmem:[#allocation2 + $0x148] sm:$0xff]
    %v251 = vld [vmem:[#allocation2 + $0x150] sm:$0xff]
    %v252 = vld [vmem:[#allocation2 + $0x158] sm:$0xff]
    %v253 = vld [vmem:[#allocation2 + $0x160] sm:$0xff]
    %v254 = vld [vmem:[#allocation2 + $0x168] sm:$0xff]
    %v255 = vld [vmem:[#allocation2 + $0x170] sm:$0xff]
    %v256 = vld [vmem:[#allocation2 + $0x178] sm:$0xff]
    %v257 = vpack.c.bf16 %v210, %v209
    %v258 = vpack.c.bf16 %v212, %v211
    %v259 = vpack.c.bf16 %v214, %v213
    %v260 = vpack.c.bf16 %v216, %v215
    %v261 = vpack.c.bf16 %v218, %v217
    %v262 = vpack.c.bf16 %v220, %v219
    %v263 = vpack.c.bf16 %v222, %v221
    %v264 = vpack.c.bf16 %v224, %v223
    %v265 = vpack.c.bf16 %v226, %v225
    %v266 = vpack.c.bf16 %v228, %v227
    %v267 = vpack.c.bf16 %v230, %v229
    %v268 = vpack.c.bf16 %v232, %v231
    %v269 = vpack.c.bf16 %v234, %v233
    %v270 = vpack.c.bf16 %v236, %v235
    %v271 = vpack.c.bf16 %v238, %v237
    %v272 = vpack.c.bf16 %v240, %v239
    %v273 = vpack.c.bf16 %v242, %v241
    %v274 = vpack.c.bf16 %v244, %v243
    %v275 = vpack.c.bf16 %v246, %v245
    %v276 = vpack.c.bf16 %v248, %v247
    %v277 = vpack.c.bf16 %v250, %v249
    %v278 = vpack.c.bf16 %v252, %v251
    %v279 = vpack.c.bf16 %v254, %v253
    %v280 = vpack.c.bf16 %v256, %v255
    %v281 = vld [vmem:[%s0] sm:$0xff]
    %v282 = vld [vmem:[%s0 + $0x8] sm:$0xf]
    %v283 = vld [vmem:[%s0 + $0xc] sm:$0xff]
    %v284 = vld [vmem:[%s0 + $0x14] sm:$0xf]
    %v285 = vld [vmem:[%s0 + $0x18] sm:$0xff]
    %v286 = vld [vmem:[%s0 + $0x20] sm:$0xf]
    %v287 = vld [vmem:[%s0 + $0x24] sm:$0xff]
    %v288 = vld [vmem:[%s0 + $0x2c] sm:$0xf]
    %v289 = vld [vmem:[%s0 + $0x30] sm:$0xff]
    %v290 = vld [vmem:[%s0 + $0x38] sm:$0xf]
    %v291 = vld [vmem:[%s0 + $0x3c] sm:$0xff]
    %v292 = vld [vmem:[%s0 + $0x44] sm:$0xf]
    %v293 = vld [vmem:[%s0 + $0x48] sm:$0xff]
    %v294 = vld [vmem:[%s0 + $0x50] sm:$0xf]
    %v295 = vld [vmem:[%s0 + $0x54] sm:$0xff]
    %v296 = vld [vmem:[%s0 + $0x5c] sm:$0xf]
    %v297 = vld [vmem:[%s0 + $0x60] sm:$0xff]
    %v298 = vld [vmem:[%s0 + $0x68] sm:$0xf]
    %v299 = vld [vmem:[%s0 + $0x6c] sm:$0xff]
    %v300 = vld [vmem:[%s0 + $0x74] sm:$0xf]
    %v301 = vld [vmem:[%s0 + $0x78] sm:$0xff]
    %v302 = vld [vmem:[%s0 + $0x80] sm:$0xf]
    %v303 = vld [vmem:[%s0 + $0x84] sm:$0xff]
    %v304 = vld [vmem:[%s0 + $0x8c] sm:$0xf]
    %v305 = vld [vmem:[%s0 + $0x90] sm:$0xff]
    %v306 = vld [vmem:[%s0 + $0x98] sm:$0xf]
    %v307 = vld [vmem:[%s0 + $0x9c] sm:$0xff]
    %v308 = vld [vmem:[%s0 + $0xa4] sm:$0xf]
    %v309 = vld [vmem:[%s0 + $0xa8] sm:$0xff]
    %v310 = vld [vmem:[%s0 + $0xb0] sm:$0xf]
    %v311 = vld [vmem:[%s0 + $0xb4] sm:$0xff]
    %v312 = vld [vmem:[%s0 + $0xbc] sm:$0xf]
    %v313 = vld [vmem:[%s0 + $0xc0] sm:$0xff]
    %v314 = vld [vmem:[%s0 + $0xc8] sm:$0xf]
    %v315 = vld [vmem:[%s0 + $0xcc] sm:$0xff]
    %v316 = vld [vmem:[%s0 + $0xd4] sm:$0xf]
    %v317 = vld [vmem:[%s0 + $0xd8] sm:$0xff]
    %v318 = vld [vmem:[%s0 + $0xe0] sm:$0xf]
    %v319 = vld [vmem:[%s0 + $0xe4] sm:$0xff]
    %v320 = vld [vmem:[%s0 + $0xec] sm:$0xf]
    %v321 = vld [vmem:[%s0 + $0xf0] sm:$0xff]
    %v322 = vld [vmem:[%s0 + $0xf8] sm:$0xf]
    %v323 = vld [vmem:[%s0 + $0xfc] sm:$0xff]
    %v324 = vld [vmem:[%s0 + $0x104] sm:$0xf]
    %v325 = vld [vmem:[%s0 + $0x108] sm:$0xff]
    %v326 = vld [vmem:[%s0 + $0x110] sm:$0xf]
    %v327 = vld [vmem:[%s0 + $0x114] sm:$0xff]
    %v328 = vld [vmem:[%s0 + $0x11c] sm:$0xf]
    %v329 = vld [vmem:[%s0 + $0x120] sm:$0xff]
    %v330 = vld [vmem:[%s0 + $0x128] sm:$0xf]
    %v331 = vld [vmem:[%s0 + $0x12c] sm:$0xff]
    %v332 = vld [vmem:[%s0 + $0x134] sm:$0xf]
    %v333 = vld [vmem:[%s0 + $0x138] sm:$0xff]
    %v334 = vld [vmem:[%s0 + $0x140] sm:$0xf]
    %v335 = vld [vmem:[%s0 + $0x144] sm:$0xff]
    %v336 = vld [vmem:[%s0 + $0x14c] sm:$0xf]
    %v337 = vld [vmem:[%s0 + $0x150] sm:$0xff]
    %v338 = vld [vmem:[%s0 + $0x158] sm:$0xf]
    %v339 = vld [vmem:[%s0 + $0x15c] sm:$0xff]
    %v340 = vld [vmem:[%s0 + $0x164] sm:$0xf]
    %v341 = vld [vmem:[%s0 + $0x168] sm:$0xff]
    %v342 = vld [vmem:[%s0 + $0x170] sm:$0xf]
    %v343 = vld [vmem:[%s0 + $0x174] sm:$0xff]
    %v344 = vld [vmem:[%s0 + $0x17c] sm:$0xf]
    %v345 = vld [vmem:[%s0 + $0x180] sm:$0xff]
    %v346 = vld [vmem:[%s0 + $0x188] sm:$0xf]
    %v347 = vld [vmem:[%s0 + $0x18c] sm:$0xff]
    %v348 = vld [vmem:[%s0 + $0x194] sm:$0xf]
    %v349 = vld [vmem:[%s0 + $0x198] sm:$0xff]
    %v350 = vld [vmem:[%s0 + $0x1a0] sm:$0xf]
    %v351 = vld [vmem:[%s0 + $0x1a4] sm:$0xff]
    %v352 = vld [vmem:[%s0 + $0x1ac] sm:$0xf]
    %v353 = vld [vmem:[%s0 + $0x1b0] sm:$0xff]
    %v354 = vld [vmem:[%s0 + $0x1b8] sm:$0xf]
    %v355 = vld [vmem:[%s0 + $0x1bc] sm:$0xff]
    %v356 = vld [vmem:[%s0 + $0x1c4] sm:$0xf]
    %v357 = vld [vmem:[%s0 + $0x1c8] sm:$0xff]
    %v358 = vld [vmem:[%s0 + $0x1d0] sm:$0xf]
    %v359 = vld [vmem:[%s0 + $0x1d4] sm:$0xff]
    %v360 = vld [vmem:[%s0 + $0x1dc] sm:$0xf]
    %v361 = vld [vmem:[%s0 + $0x1e0] sm:$0xff]
    %v362 = vld [vmem:[%s0 + $0x1e8] sm:$0xf]
    %v363 = vld [vmem:[%s0 + $0x1ec] sm:$0xff]
    %v364 = vld [vmem:[%s0 + $0x1f4] sm:$0xf]
    %v365 = vld [vmem:[%s0 + $0x1f8] sm:$0xff]
    %v366 = vld [vmem:[%s0 + $0x200] sm:$0xf]
    %v367 = vld [vmem:[%s0 + $0x204] sm:$0xff]
    %v368 = vld [vmem:[%s0 + $0x20c] sm:$0xf]
    %v369 = vld [vmem:[%s0 + $0x210] sm:$0xff]
    %v370 = vld [vmem:[%s0 + $0x218] sm:$0xf]
    %v371 = vld [vmem:[%s0 + $0x21c] sm:$0xff]
    %v372 = vld [vmem:[%s0 + $0x224] sm:$0xf]
    %v373 = vld [vmem:[%s0 + $0x228] sm:$0xff]
    %v374 = vld [vmem:[%s0 + $0x230] sm:$0xf]
    %v375 = vld [vmem:[%s0 + $0x234] sm:$0xff]
    %v376 = vld [vmem:[%s0 + $0x23c] sm:$0xf]
    %v377 = vld [vmem:[#allocation3] sm:$0xff]
    %v378 = vld [vmem:[#allocation3 + $0x8] sm:$0xff]
    %v379 = vld [vmem:[#allocation3 + $0x10] sm:$0xff]
    %v380 = vld [vmem:[#allocation3 + $0x18] sm:$0xff]
    %v381 = vld [vmem:[#allocation3 + $0x20] sm:$0xff]
    %v382 = vld [vmem:[#allocation3 + $0x28] sm:$0xff]
    %v383 = vld [vmem:[#allocation3 + $0x30] sm:$0xff]
    %v384 = vld [vmem:[#allocation3 + $0x38] sm:$0xff]
    %v385 = vld [vmem:[#allocation3 + $0x40] sm:$0xff]
    %v386 = vld [vmem:[#allocation3 + $0x48] sm:$0xff]
    %v387 = vld [vmem:[#allocation3 + $0x50] sm:$0xff]
    %v388 = vld [vmem:[#allocation3 + $0x58] sm:$0xff]
    %v389 = vld [vmem:[#allocation3 + $0x60] sm:$0xff]
    %v390 = vld [vmem:[#allocation3 + $0x68] sm:$0xff]
    %v391 = vld [vmem:[#allocation3 + $0x70] sm:$0xff]
    %v392 = vld [vmem:[#allocation3 + $0x78] sm:$0xff]
    %v393 = vld [vmem:[#allocation3 + $0x80] sm:$0xff]
    %v394 = vld [vmem:[#allocation3 + $0x88] sm:$0xff]
    %v395 = vld [vmem:[#allocation3 + $0x90] sm:$0xff]
    %v396 = vld [vmem:[#allocation3 + $0x98] sm:$0xff]
    %v397 = vld [vmem:[#allocation3 + $0xa0] sm:$0xff]
    %v398 = vld [vmem:[#allocation3 + $0xa8] sm:$0xff]
    %v399 = vld [vmem:[#allocation3 + $0xb0] sm:$0xff]
    %v400 = vld [vmem:[#allocation3 + $0xb8] sm:$0xff]
    %v401 = vld [vmem:[#allocation3 + $0xc0] sm:$0xff]
    %v402 = vld [vmem:[#allocation3 + $0xc8] sm:$0xff]
    %v403 = vld [vmem:[#allocation3 + $0xd0] sm:$0xff]
    %v404 = vld [vmem:[#allocation3 + $0xd8] sm:$0xff]
    %v405 = vld [vmem:[#allocation3 + $0xe0] sm:$0xff]
    %v406 = vld [vmem:[#allocation3 + $0xe8] sm:$0xff]
    %v407 = vld [vmem:[#allocation3 + $0xf0] sm:$0xff]
    %v408 = vld [vmem:[#allocation3 + $0xf8] sm:$0xff]
    %v409 = vld [vmem:[#allocation3 + $0x100] sm:$0xff]
    %v410 = vld [vmem:[#allocation3 + $0x108] sm:$0xff]
    %v411 = vld [vmem:[#allocation3 + $0x110] sm:$0xff]
    %v412 = vld [vmem:[#allocation3 + $0x118] sm:$0xff]
    %v413 = vld [vmem:[#allocation3 + $0x120] sm:$0xff]
    %v414 = vld [vmem:[#allocation3 + $0x128] sm:$0xff]
    %v415 = vld [vmem:[#allocation3 + $0x130] sm:$0xff]
    %v416 = vld [vmem:[#allocation3 + $0x138] sm:$0xff]
    %v417 = vld [vmem:[#allocation3 + $0x140] sm:$0xff]
    %v418 = vld [vmem:[#allocation3 + $0x148] sm:$0xff]
    %v419 = vld [vmem:[#allocation3 + $0x150] sm:$0xff]
    %v420 = vld [vmem:[#allocation3 + $0x158] sm:$0xff]
    %v421 = vld [vmem:[#allocation3 + $0x160] sm:$0xff]
    %v422 = vld [vmem:[#allocation3 + $0x168] sm:$0xff]
    %v423 = vld [vmem:[#allocation3 + $0x170] sm:$0xff]
    %v424 = vld [vmem:[#allocation3 + $0x178] sm:$0xff]
    %v521 = vunpack.c.l.b16 %v281
    %v522 = vunpack.c.h.b16 %v281
    %v523 = vunpack.c.l.b16 %v282
    %v524 = vunpack.c.l.b16 %v283
    %v525 = vunpack.c.h.b16 %v283
    %v526 = vunpack.c.l.b16 %v284
    %v527 = vunpack.c.l.b16 %v285
    %v528 = vunpack.c.h.b16 %v285
    %v529 = vunpack.c.l.b16 %v286
    %v530 = vunpack.c.l.b16 %v287
    %v531 = vunpack.c.h.b16 %v287
    %v532 = vunpack.c.l.b16 %v288
    %v533 = vunpack.c.l.b16 %v289
    %v534 = vunpack.c.h.b16 %v289
    %v535 = vunpack.c.l.b16 %v290
    %v536 = vunpack.c.l.b16 %v291
    %v537 = vunpack.c.h.b16 %v291
    %v538 = vunpack.c.l.b16 %v292
    %v539 = vunpack.c.l.b16 %v293
    %v540 = vunpack.c.h.b16 %v293
    %v541 = vunpack.c.l.b16 %v294
    %v542 = vunpack.c.l.b16 %v295
    %v543 = vunpack.c.h.b16 %v295
    %v544 = vunpack.c.l.b16 %v296
    %v545 = vunpack.c.l.b16 %v297
    %v546 = vunpack.c.h.b16 %v297
    %v547 = vunpack.c.l.b16 %v298
    %v548 = vunpack.c.l.b16 %v299
    %v549 = vunpack.c.h.b16 %v299
    %v550 = vunpack.c.l.b16 %v300
    %v551 = vunpack.c.l.b16 %v301
    %v552 = vunpack.c.h.b16 %v301
    %v553 = vunpack.c.l.b16 %v302
    %v554 = vunpack.c.l.b16 %v303
    %v555 = vunpack.c.h.b16 %v303
    %v556 = vunpack.c.l.b16 %v304
    %v557 = vunpack.c.l.b16 %v305
    %v558 = vunpack.c.h.b16 %v305
    %v559 = vunpack.c.l.b16 %v306
    %v560 = vunpack.c.l.b16 %v307
    %v561 = vunpack.c.h.b16 %v307
    %v562 = vunpack.c.l.b16 %v308
    %v563 = vunpack.c.l.b16 %v309
    %v564 = vunpack.c.h.b16 %v309
    %v565 = vunpack.c.l.b16 %v310
    %v566 = vunpack.c.l.b16 %v311
    %v567 = vunpack.c.h.b16 %v311
    %v568 = vunpack.c.l.b16 %v312
    %v569 = vunpack.c.l.b16 %v313
    %v570 = vunpack.c.h.b16 %v313
    %v571 = vunpack.c.l.b16 %v314
    %v572 = vunpack.c.l.b16 %v315
    %v573 = vunpack.c.h.b16 %v315
    %v574 = vunpack.c.l.b16 %v316
    %v575 = vunpack.c.l.b16 %v317
    %v576 = vunpack.c.h.b16 %v317
    %v577 = vunpack.c.l.b16 %v318
    %v578 = vunpack.c.l.b16 %v319
    %v579 = vunpack.c.h.b16 %v319
    %v580 = vunpack.c.l.b16 %v320
    %v581 = vunpack.c.l.b16 %v321
    %v582 = vunpack.c.h.b16 %v321
    %v583 = vunpack.c.l.b16 %v322
    %v584 = vunpack.c.l.b16 %v323
    %v585 = vunpack.c.h.b16 %v323
    %v586 = vunpack.c.l.b16 %v324
    %v587 = vunpack.c.l.b16 %v325
    %v588 = vunpack.c.h.b16 %v325
    %v589 = vunpack.c.l.b16 %v326
    %v590 = vunpack.c.l.b16 %v327
    %v591 = vunpack.c.h.b16 %v327
    %v592 = vunpack.c.l.b16 %v328
    %v593 = vunpack.c.l.b16 %v329
    %v594 = vunpack.c.h.b16 %v329
    %v595 = vunpack.c.l.b16 %v330
    %v596 = vunpack.c.l.b16 %v331
    %v597 = vunpack.c.h.b16 %v331
    %v598 = vunpack.c.l.b16 %v332
    %v599 = vunpack.c.l.b16 %v333
    %v600 = vunpack.c.h.b16 %v333
    %v601 = vunpack.c.l.b16 %v334
    %v602 = vunpack.c.l.b16 %v335
    %v603 = vunpack.c.h.b16 %v335
    %v604 = vunpack.c.l.b16 %v336
    %v605 = vunpack.c.l.b16 %v337
    %v606 = vunpack.c.h.b16 %v337
    %v607 = vunpack.c.l.b16 %v338
    %v608 = vunpack.c.l.b16 %v339
    %v609 = vunpack.c.h.b16 %v339
    %v610 = vunpack.c.l.b16 %v340
    %v611 = vunpack.c.l.b16 %v341
    %v612 = vunpack.c.h.b16 %v341
    %v613 = vunpack.c.l.b16 %v342
    %v614 = vunpack.c.l.b16 %v343
    %v615 = vunpack.c.h.b16 %v343
    %v616 = vunpack.c.l.b16 %v344
    %v617 = vunpack.c.l.b16 %v345
    %v618 = vunpack.c.h.b16 %v345
    %v619 = vunpack.c.l.b16 %v346
    %v620 = vunpack.c.l.b16 %v347
    %v621 = vunpack.c.h.b16 %v347
    %v622 = vunpack.c.l.b16 %v348
    %v623 = vunpack.c.l.b16 %v349
    %v624 = vunpack.c.h.b16 %v349
    %v625 = vunpack.c.l.b16 %v350
    %v626 = vunpack.c.l.b16 %v351
    %v627 = vunpack.c.h.b16 %v351
    %v628 = vunpack.c.l.b16 %v352
    %v629 = vunpack.c.l.b16 %v353
    %v630 = vunpack.c.h.b16 %v353
    %v631 = vunpack.c.l.b16 %v354
    %v632 = vunpack.c.l.b16 %v355
    %v633 = vunpack.c.h.b16 %v355
    %v634 = vunpack.c.l.b16 %v356
    %v635 = vunpack.c.l.b16 %v357
    %v636 = vunpack.c.h.b16 %v357
    %v637 = vunpack.c.l.b16 %v358
    %v638 = vunpack.c.l.b16 %v359
    %v639 = vunpack.c.h.b16 %v359
    %v640 = vunpack.c.l.b16 %v360
    %v641 = vunpack.c.l.b16 %v361
    %v642 = vunpack.c.h.b16 %v361
    %v643 = vunpack.c.l.b16 %v362
    %v644 = vunpack.c.l.b16 %v363
    %v645 = vunpack.c.h.b16 %v363
    %v646 = vunpack.c.l.b16 %v364
    %v647 = vunpack.c.l.b16 %v365
    %v648 = vunpack.c.h.b16 %v365
    %v649 = vunpack.c.l.b16 %v366
    %v650 = vunpack.c.l.b16 %v367
    %v651 = vunpack.c.h.b16 %v367
    %v652 = vunpack.c.l.b16 %v368
    %v653 = vunpack.c.l.b16 %v369
    %v654 = vunpack.c.h.b16 %v369
    %v655 = vunpack.c.l.b16 %v370
    %v656 = vunpack.c.l.b16 %v371
    %v657 = vunpack.c.h.b16 %v371
    %v658 = vunpack.c.l.b16 %v372
    %v659 = vunpack.c.l.b16 %v373
    %v660 = vunpack.c.h.b16 %v373
    %v661 = vunpack.c.l.b16 %v374
    %v662 = vunpack.c.l.b16 %v375
    %v663 = vunpack.c.h.b16 %v375
    %v664 = vunpack.c.l.b16 %v376
    %v665 = vpack.c.b16 %v524, %v521
    %v666 = vpack.c.b16 %v525, %v522
    %v667 = vpack.c.b16 %v526, %v523
    %v668 = vpack.c.b16 %v530, %v527
    %v669 = vpack.c.b16 %v531, %v528
    %v670 = vpack.c.b16 %v532, %v529
    %v671 = vpack.c.b16 %v536, %v533
    %v672 = vpack.c.b16 %v537, %v534
    %v673 = vpack.c.b16 %v538, %v535
    %v674 = vpack.c.b16 %v542, %v539
    %v675 = vpack.c.b16 %v543, %v540
    %v676 = vpack.c.b16 %v544, %v541
    %v677 = vpack.c.b16 %v548, %v545
    %v678 = vpack.c.b16 %v549, %v546
    %v679 = vpack.c.b16 %v550, %v547
    %v680 = vpack.c.b16 %v554, %v551
    %v681 = vpack.c.b16 %v555, %v552
    %v682 = vpack.c.b16 %v556, %v553
    %v683 = vpack.c.b16 %v560, %v557
    %v684 = vpack.c.b16 %v561, %v558
    %v685 = vpack.c.b16 %v562, %v559
    %v686 = vpack.c.b16 %v566, %v563
    %v687 = vpack.c.b16 %v567, %v564
    %v688 = vpack.c.b16 %v568, %v565
    %v689 = vpack.c.b16 %v572, %v569
    %v690 = vpack.c.b16 %v573, %v570
    %v691 = vpack.c.b16 %v574, %v571
    %v692 = vpack.c.b16 %v578, %v575
    %v693 = vpack.c.b16 %v579, %v576
    %v694 = vpack.c.b16 %v580, %v577
    %v695 = vpack.c.b16 %v584, %v581
    %v696 = vpack.c.b16 %v585, %v582
    %v697 = vpack.c.b16 %v586, %v583
    %v698 = vpack.c.b16 %v590, %v587
    %v699 = vpack.c.b16 %v591, %v588
    %v700 = vpack.c.b16 %v592, %v589
    %v701 = vpack.c.b16 %v596, %v593
    %v702 = vpack.c.b16 %v597, %v594
    %v703 = vpack.c.b16 %v598, %v595
    %v704 = vpack.c.b16 %v602, %v599
    %v705 = vpack.c.b16 %v603, %v600
    %v706 = vpack.c.b16 %v604, %v601
    %v707 = vpack.c.b16 %v608, %v605
    %v708 = vpack.c.b16 %v609, %v606
    %v709 = vpack.c.b16 %v610, %v607
    %v710 = vpack.c.b16 %v614, %v611
    %v711 = vpack.c.b16 %v615, %v612
    %v712 = vpack.c.b16 %v616, %v613
    %v713 = vpack.c.b16 %v620, %v617
    %v714 = vpack.c.b16 %v621, %v618
    %v715 = vpack.c.b16 %v622, %v619
    %v716 = vpack.c.b16 %v626, %v623
    %v717 = vpack.c.b16 %v627, %v624
    %v718 = vpack.c.b16 %v628, %v625
    %v719 = vpack.c.b16 %v632, %v629
    %v720 = vpack.c.b16 %v633, %v630
    %v721 = vpack.c.b16 %v634, %v631
    %v722 = vpack.c.b16 %v638, %v635
    %v723 = vpack.c.b16 %v639, %v636
    %v724 = vpack.c.b16 %v640, %v637
    %v725 = vpack.c.b16 %v644, %v641
    %v726 = vpack.c.b16 %v645, %v642
    %v727 = vpack.c.b16 %v646, %v643
    %v728 = vpack.c.b16 %v650, %v647
    %v729 = vpack.c.b16 %v651, %v648
    %v730 = vpack.c.b16 %v652, %v649
    %v731 = vpack.c.b16 %v656, %v653
    %v732 = vpack.c.b16 %v657, %v654
    %v733 = vpack.c.b16 %v658, %v655
    %v734 = vpack.c.b16 %v662, %v659
    %v735 = vpack.c.b16 %v663, %v660
    %v736 = vpack.c.b16 %v664, %v661
    %809 = vmatpush.bf16.msra.mxu0 %v264
    %810 = vmatpush.bf16.msra.mxu0 %v263
    %811 = vmatpush.bf16.msra.mxu0 %v262
    %812 = vmatpush.bf16.msra.mxu0 %v261
    %813 = vmatpush.bf16.msra.mxu0 %v260
    %814 = vmatpush.bf16.msra.mxu0 %v259
    %815 = vmatpush.bf16.msra.mxu0 %v258
    %816 = vmatpush.bf16.msra.mxu0 %v257
    %817 = vmatmul.bf16.gmra.mxu0 %v665
    %v818 = vpop.f32.mrf.mxu0
    %v819 = vadd.f32 %v377, %v818
    %v820 = vpop.f32.mrf.mxu0
    %v821 = vadd.f32 %v378, %v820
    %822 = vmatmul.bf16.gmra.mxu0 %v668
    %v823 = vpop.f32.mrf.mxu0
    %v824 = vadd.f32 %v379, %v823
    %v825 = vpop.f32.mrf.mxu0
    %v826 = vadd.f32 %v380, %v825
    %827 = vmatmul.bf16.gmra.mxu0 %v671
    %v828 = vpop.f32.mrf.mxu0
    %v829 = vadd.f32 %v381, %v828
    %v830 = vpop.f32.mrf.mxu0
    %v831 = vadd.f32 %v382, %v830
    %832 = vmatmul.bf16.gmra.mxu0 %v674
    %v833 = vpop.f32.mrf.mxu0
    %v834 = vadd.f32 %v383, %v833
    %v835 = vpop.f32.mrf.mxu0
    %v836 = vadd.f32 %v384, %v835
    %837 = vmatmul.bf16.gmra.mxu0 %v677
    %v838 = vpop.f32.mrf.mxu0
    %v839 = vadd.f32 %v385, %v838
    %v840 = vpop.f32.mrf.mxu0
    %v841 = vadd.f32 %v386, %v840
    %842 = vmatmul.bf16.gmra.mxu0 %v680
    %v843 = vpop.f32.mrf.mxu0
    %v844 = vadd.f32 %v387, %v843
    %v845 = vpop.f32.mrf.mxu0
    %v846 = vadd.f32 %v388, %v845
    %847 = vmatmul.bf16.gmra.mxu0 %v683
    %v848 = vpop.f32.mrf.mxu0
    %v849 = vadd.f32 %v389, %v848
    %v850 = vpop.f32.mrf.mxu0
    %v851 = vadd.f32 %v390, %v850
    %852 = vmatmul.bf16.gmra.mxu0 %v686
    %v853 = vpop.f32.mrf.mxu0
    %v854 = vadd.f32 %v391, %v853
    %v855 = vpop.f32.mrf.mxu0
    %v856 = vadd.f32 %v392, %v855
    %857 = vmatmul.bf16.gmra.mxu0 %v689
    %v858 = vpop.f32.mrf.mxu0
    %v859 = vadd.f32 %v393, %v858
    %v860 = vpop.f32.mrf.mxu0
    %v861 = vadd.f32 %v394, %v860
    %862 = vmatmul.bf16.gmra.mxu0 %v692
    %v863 = vpop.f32.mrf.mxu0
    %v864 = vadd.f32 %v395, %v863
    %v865 = vpop.f32.mrf.mxu0
    %v866 = vadd.f32 %v396, %v865
    %867 = vmatmul.bf16.gmra.mxu0 %v695
    %v868 = vpop.f32.mrf.mxu0
    %v869 = vadd.f32 %v397, %v868
    %v870 = vpop.f32.mrf.mxu0
    %v871 = vadd.f32 %v398, %v870
    %872 = vmatmul.bf16.gmra.mxu0 %v698
    %v873 = vpop.f32.mrf.mxu0
    %v874 = vadd.f32 %v399, %v873
    %v875 = vpop.f32.mrf.mxu0
    %v876 = vadd.f32 %v400, %v875
    %877 = vmatmul.bf16.gmra.mxu0 %v701
    %v878 = vpop.f32.mrf.mxu0
    %v879 = vadd.f32 %v401, %v878
    %v880 = vpop.f32.mrf.mxu0
    %v881 = vadd.f32 %v402, %v880
    %882 = vmatmul.bf16.gmra.mxu0 %v704
    %v883 = vpop.f32.mrf.mxu0
    %v884 = vadd.f32 %v403, %v883
    %v885 = vpop.f32.mrf.mxu0
    %v886 = vadd.f32 %v404, %v885
    %887 = vmatmul.bf16.gmra.mxu0 %v707
    %v888 = vpop.f32.mrf.mxu0
    %v889 = vadd.f32 %v405, %v888
    %v890 = vpop.f32.mrf.mxu0
    %v891 = vadd.f32 %v406, %v890
    %892 = vmatmul.bf16.gmra.mxu0 %v710
    %v893 = vpop.f32.mrf.mxu0
    %v894 = vadd.f32 %v407, %v893
    %v895 = vpop.f32.mrf.mxu0
    %v896 = vadd.f32 %v408, %v895
    %897 = vmatmul.bf16.gmra.mxu0 %v713
    %v898 = vpop.f32.mrf.mxu0
    %v899 = vadd.f32 %v409, %v898
    %v900 = vpop.f32.mrf.mxu0
    %v901 = vadd.f32 %v410, %v900
    %902 = vmatmul.bf16.gmra.mxu0 %v716
    %v903 = vpop.f32.mrf.mxu0
    %v904 = vadd.f32 %v411, %v903
    %v905 = vpop.f32.mrf.mxu0
    %v906 = vadd.f32 %v412, %v905
    %907 = vmatmul.bf16.gmra.mxu0 %v719
    %v908 = vpop.f32.mrf.mxu0
    %v909 = vadd.f32 %v413, %v908
    %v910 = vpop.f32.mrf.mxu0
    %v911 = vadd.f32 %v414, %v910
    %912 = vmatmul.bf16.gmra.mxu0 %v722
    %v913 = vpop.f32.mrf.mxu0
    %v914 = vadd.f32 %v415, %v913
    %v915 = vpop.f32.mrf.mxu0
    %v916 = vadd.f32 %v416, %v915
    %917 = vmatmul.bf16.gmra.mxu0 %v725
    %v918 = vpop.f32.mrf.mxu0
    %v919 = vadd.f32 %v417, %v918
    %v920 = vpop.f32.mrf.mxu0
    %v921 = vadd.f32 %v418, %v920
    %922 = vmatmul.bf16.gmra.mxu0 %v728
    %v923 = vpop.f32.mrf.mxu0
    %v924 = vadd.f32 %v419, %v923
    %v925 = vpop.f32.mrf.mxu0
    %v926 = vadd.f32 %v420, %v925
    %927 = vmatmul.bf16.gmra.mxu0 %v731
    %v928 = vpop.f32.mrf.mxu0
    %v929 = vadd.f32 %v421, %v928
    %v930 = vpop.f32.mrf.mxu0
    %v931 = vadd.f32 %v422, %v930
    %932 = vmatmul.bf16.gmra.mxu0 %v734
    %v933 = vpop.f32.mrf.mxu0
    %v934 = vadd.f32 %v423, %v933
    %v935 = vpop.f32.mrf.mxu0
    %v936 = vadd.f32 %v424, %v935
    %937 = vdwg.mxu0
    %938 = vmatpush.bf16.msra.mxu0 %v272
    %939 = vmatpush.bf16.msra.mxu0 %v271
    %940 = vmatpush.bf16.msra.mxu0 %v270
    %941 = vmatpush.bf16.msra.mxu0 %v269
    %942 = vmatpush.bf16.msra.mxu0 %v268
    %943 = vmatpush.bf16.msra.mxu0 %v267
    %944 = vmatpush.bf16.msra.mxu0 %v266
    %945 = vmatpush.bf16.msra.mxu0 %v265
    %946 = vmatmul.bf16.gmra.mxu0 %v666
    %v947 = vpop.f32.mrf.mxu0
    %v948 = vadd.f32 %v819, %v947
    %v949 = vpop.f32.mrf.mxu0
    %v950 = vadd.f32 %v821, %v949
    %951 = vmatmul.bf16.gmra.mxu0 %v669
    %v952 = vpop.f32.mrf.mxu0
    %v953 = vadd.f32 %v824, %v952
    %v954 = vpop.f32.mrf.mxu0
    %v955 = vadd.f32 %v826, %v954
    %956 = vmatmul.bf16.gmra.mxu0 %v672
    %v957 = vpop.f32.mrf.mxu0
    %v958 = vadd.f32 %v829, %v957
    %v959 = vpop.f32.mrf.mxu0
    %v960 = vadd.f32 %v831, %v959
    %961 = vmatmul.bf16.gmra.mxu0 %v675
    %v962 = vpop.f32.mrf.mxu0
    %v963 = vadd.f32 %v834, %v962
    %v964 = vpop.f32.mrf.mxu0
    %v965 = vadd.f32 %v836, %v964
    %966 = vmatmul.bf16.gmra.mxu0 %v678
    %v967 = vpop.f32.mrf.mxu0
    %v968 = vadd.f32 %v839, %v967
    %v969 = vpop.f32.mrf.mxu0
    %v970 = vadd.f32 %v841, %v969
    %971 = vmatmul.bf16.gmra.mxu0 %v681
    %v972 = vpop.f32.mrf.mxu0
    %v973 = vadd.f32 %v844, %v972
    %v974 = vpop.f32.mrf.mxu0
    %v975 = vadd.f32 %v846, %v974
    %976 = vmatmul.bf16.gmra.mxu0 %v684
    %v977 = vpop.f32.mrf.mxu0
    %v978 = vadd.f32 %v849, %v977
    %v979 = vpop.f32.mrf.mxu0
    %v980 = vadd.f32 %v851, %v979
    %981 = vmatmul.bf16.gmra.mxu0 %v687
    %v982 = vpop.f32.mrf.mxu0
    %v983 = vadd.f32 %v854, %v982
    %v984 = vpop.f32.mrf.mxu0
    %v985 = vadd.f32 %v856, %v984
    %986 = vmatmul.bf16.gmra.mxu0 %v690
    %v987 = vpop.f32.mrf.mxu0
    %v988 = vadd.f32 %v859, %v987
    %v989 = vpop.f32.mrf.mxu0
    %v990 = vadd.f32 %v861, %v989
    %991 = vmatmul.bf16.gmra.mxu0 %v693
    %v992 = vpop.f32.mrf.mxu0
    %v993 = vadd.f32 %v864, %v992
    %v994 = vpop.f32.mrf.mxu0
    %v995 = vadd.f32 %v866, %v994
    %996 = vmatmul.bf16.gmra.mxu0 %v696
    %v997 = vpop.f32.mrf.mxu0
    %v998 = vadd.f32 %v869, %v997
    %v999 = vpop.f32.mrf.mxu0
    %v1000 = vadd.f32 %v871, %v999
    %1001 = vmatmul.bf16.gmra.mxu0 %v699
    %v1002 = vpop.f32.mrf.mxu0
    %v1003 = vadd.f32 %v874, %v1002
    %v1004 = vpop.f32.mrf.mxu0
    %v1005 = vadd.f32 %v876, %v1004
    %1006 = vmatmul.bf16.gmra.mxu0 %v702
    %v1007 = vpop.f32.mrf.mxu0
    %v1008 = vadd.f32 %v879, %v1007
    %v1009 = vpop.f32.mrf.mxu0
    %v1010 = vadd.f32 %v881, %v1009
    %1011 = vmatmul.bf16.gmra.mxu0 %v705
    %v1012 = vpop.f32.mrf.mxu0
    %v1013 = vadd.f32 %v884, %v1012
    %v1014 = vpop.f32.mrf.mxu0
    %v1015 = vadd.f32 %v886, %v1014
    %1016 = vmatmul.bf16.gmra.mxu0 %v708
    %v1017 = vpop.f32.mrf.mxu0
    %v1018 = vadd.f32 %v889, %v1017
    %v1019 = vpop.f32.mrf.mxu0
    %v1020 = vadd.f32 %v891, %v1019
    %1021 = vmatmul.bf16.gmra.mxu0 %v711
    %v1022 = vpop.f32.mrf.mxu0
    %v1023 = vadd.f32 %v894, %v1022
    %v1024 = vpop.f32.mrf.mxu0
    %v1025 = vadd.f32 %v896, %v1024
    %1026 = vmatmul.bf16.gmra.mxu0 %v714
    %v1027 = vpop.f32.mrf.mxu0
    %v1028 = vadd.f32 %v899, %v1027
    %v1029 = vpop.f32.mrf.mxu0
    %v1030 = vadd.f32 %v901, %v1029
    %1031 = vmatmul.bf16.gmra.mxu0 %v717
    %v1032 = vpop.f32.mrf.mxu0
    %v1033 = vadd.f32 %v904, %v1032
    %v1034 = vpop.f32.mrf.mxu0
    %v1035 = vadd.f32 %v906, %v1034
    %1036 = vmatmul.bf16.gmra.mxu0 %v720
    %v1037 = vpop.f32.mrf.mxu0
    %v1038 = vadd.f32 %v909, %v1037
    %v1039 = vpop.f32.mrf.mxu0
    %v1040 = vadd.f32 %v911, %v1039
    %1041 = vmatmul.bf16.gmra.mxu0 %v723
    %v1042 = vpop.f32.mrf.mxu0
    %v1043 = vadd.f32 %v914, %v1042
    %v1044 = vpop.f32.mrf.mxu0
    %v1045 = vadd.f32 %v916, %v1044
    %1046 = vmatmul.bf16.gmra.mxu0 %v726
    %v1047 = vpop.f32.mrf.mxu0
    %v1048 = vadd.f32 %v919, %v1047
    %v1049 = vpop.f32.mrf.mxu0
    %v1050 = vadd.f32 %v921, %v1049
    %1051 = vmatmul.bf16.gmra.mxu0 %v729
    %v1052 = vpop.f32.mrf.mxu0
    %v1053 = vadd.f32 %v924, %v1052
    %v1054 = vpop.f32.mrf.mxu0
    %v1055 = vadd.f32 %v926, %v1054
    %1056 = vmatmul.bf16.gmra.mxu0 %v732
    %v1057 = vpop.f32.mrf.mxu0
    %v1058 = vadd.f32 %v929, %v1057
    %v1059 = vpop.f32.mrf.mxu0
    %v1060 = vadd.f32 %v931, %v1059
    %1061 = vmatmul.bf16.gmra.mxu0 %v735
    %v1062 = vpop.f32.mrf.mxu0
    %v1063 = vadd.f32 %v934, %v1062
    %v1064 = vpop.f32.mrf.mxu0
    %v1065 = vadd.f32 %v936, %v1064
    %1066 = vdwg.mxu0
    %1067 = vmatpush.bf16.msra.mxu0 %v280
    %1068 = vmatpush.bf16.msra.mxu0 %v279
    %1069 = vmatpush.bf16.msra.mxu0 %v278
    %1070 = vmatpush.bf16.msra.mxu0 %v277
    %1071 = vmatpush.bf16.msra.mxu0 %v276
    %1072 = vmatpush.bf16.msra.mxu0 %v275
    %1073 = vmatpush.bf16.msra.mxu0 %v274
    %1074 = vmatpush.bf16.msra.mxu0 %v273
    %1075 = vmatmul.bf16.gmra.mxu0 %v667
    %v1076 = vpop.f32.mrf.mxu0
    %v1077 = vadd.f32 %v948, %v1076
    %v1078 = vpop.f32.mrf.mxu0
    %v1079 = vadd.f32 %v950, %v1078
    %1080 = vmatmul.bf16.gmra.mxu0 %v670
    %v1081 = vpop.f32.mrf.mxu0
    %v1082 = vadd.f32 %v953, %v1081
    %v1083 = vpop.f32.mrf.mxu0
    %v1084 = vadd.f32 %v955, %v1083
    %1085 = vmatmul.bf16.gmra.mxu0 %v673
    %v1086 = vpop.f32.mrf.mxu0
    %v1087 = vadd.f32 %v958, %v1086
    %v1088 = vpop.f32.mrf.mxu0
    %v1089 = vadd.f32 %v960, %v1088
    %1090 = vmatmul.bf16.gmra.mxu0 %v676
    %v1091 = vpop.f32.mrf.mxu0
    %v1092 = vadd.f32 %v963, %v1091
    %v1093 = vpop.f32.mrf.mxu0
    %v1094 = vadd.f32 %v965, %v1093
    %1095 = vmatmul.bf16.gmra.mxu0 %v679
    %v1096 = vpop.f32.mrf.mxu0
    %v1097 = vadd.f32 %v968, %v1096
    %v1098 = vpop.f32.mrf.mxu0
    %v1099 = vadd.f32 %v970, %v1098
    %1100 = vmatmul.bf16.gmra.mxu0 %v682
    %v1101 = vpop.f32.mrf.mxu0
    %v1102 = vadd.f32 %v973, %v1101
    %v1103 = vpop.f32.mrf.mxu0
    %v1104 = vadd.f32 %v975, %v1103
    %1105 = vmatmul.bf16.gmra.mxu0 %v685
    %v1106 = vpop.f32.mrf.mxu0
    %v1107 = vadd.f32 %v978, %v1106
    %v1108 = vpop.f32.mrf.mxu0
    %v1109 = vadd.f32 %v980, %v1108
    %1110 = vmatmul.bf16.gmra.mxu0 %v688
    %v1111 = vpop.f32.mrf.mxu0
    %v1112 = vadd.f32 %v983, %v1111
    %v1113 = vpop.f32.mrf.mxu0
    %v1114 = vadd.f32 %v985, %v1113
    %1115 = vmatmul.bf16.gmra.mxu0 %v691
    %v1116 = vpop.f32.mrf.mxu0
    %v1117 = vadd.f32 %v988, %v1116
    %v1118 = vpop.f32.mrf.mxu0
    %v1119 = vadd.f32 %v990, %v1118
    %1120 = vmatmul.bf16.gmra.mxu0 %v694
    %v1121 = vpop.f32.mrf.mxu0
    %v1122 = vadd.f32 %v993, %v1121
    %v1123 = vpop.f32.mrf.mxu0
    %v1124 = vadd.f32 %v995, %v1123
    %1125 = vmatmul.bf16.gmra.mxu0 %v697
    %v1126 = vpop.f32.mrf.mxu0
    %v1127 = vadd.f32 %v998, %v1126
    %v1128 = vpop.f32.mrf.mxu0
    %v1129 = vadd.f32 %v1000, %v1128
    %1130 = vmatmul.bf16.gmra.mxu0 %v700
    %v1131 = vpop.f32.mrf.mxu0
    %v1132 = vadd.f32 %v1003, %v1131
    %v1133 = vpop.f32.mrf.mxu0
    %v1134 = vadd.f32 %v1005, %v1133
    %1135 = vmatmul.bf16.gmra.mxu0 %v703
    %v1136 = vpop.f32.mrf.mxu0
    %v1137 = vadd.f32 %v1008, %v1136
    %v1138 = vpop.f32.mrf.mxu0
    %v1139 = vadd.f32 %v1010, %v1138
    %1140 = vmatmul.bf16.gmra.mxu0 %v706
    %v1141 = vpop.f32.mrf.mxu0
    %v1142 = vadd.f32 %v1013, %v1141
    %v1143 = vpop.f32.mrf.mxu0
    %v1144 = vadd.f32 %v1015, %v1143
    %1145 = vmatmul.bf16.gmra.mxu0 %v709
    %v1146 = vpop.f32.mrf.mxu0
    %v1147 = vadd.f32 %v1018, %v1146
    %v1148 = vpop.f32.mrf.mxu0
    %v1149 = vadd.f32 %v1020, %v1148
    %1150 = vmatmul.bf16.gmra.mxu0 %v712
    %v1151 = vpop.f32.mrf.mxu0
    %v1152 = vadd.f32 %v1023, %v1151
    %v1153 = vpop.f32.mrf.mxu0
    %v1154 = vadd.f32 %v1025, %v1153
    %1155 = vmatmul.bf16.gmra.mxu0 %v715
    %v1156 = vpop.f32.mrf.mxu0
    %v1157 = vadd.f32 %v1028, %v1156
    %v1158 = vpop.f32.mrf.mxu0
    %v1159 = vadd.f32 %v1030, %v1158
    %1160 = vmatmul.bf16.gmra.mxu0 %v718
    %v1161 = vpop.f32.mrf.mxu0
    %v1162 = vadd.f32 %v1033, %v1161
    %v1163 = vpop.f32.mrf.mxu0
    %v1164 = vadd.f32 %v1035, %v1163
    %1165 = vmatmul.bf16.gmra.mxu0 %v721
    %v1166 = vpop.f32.mrf.mxu0
    %v1167 = vadd.f32 %v1038, %v1166
    %v1168 = vpop.f32.mrf.mxu0
    %v1169 = vadd.f32 %v1040, %v1168
    %1170 = vmatmul.bf16.gmra.mxu0 %v724
    %v1171 = vpop.f32.mrf.mxu0
    %v1172 = vadd.f32 %v1043, %v1171
    %v1173 = vpop.f32.mrf.mxu0
    %v1174 = vadd.f32 %v1045, %v1173
    %1175 = vmatmul.bf16.gmra.mxu0 %v727
    %v1176 = vpop.f32.mrf.mxu0
    %v1177 = vadd.f32 %v1048, %v1176
    %v1178 = vpop.f32.mrf.mxu0
    %v1179 = vadd.f32 %v1050, %v1178
    %1180 = vmatmul.bf16.gmra.mxu0 %v730
    %v1181 = vpop.f32.mrf.mxu0
    %v1182 = vadd.f32 %v1053, %v1181
    %v1183 = vpop.f32.mrf.mxu0
    %v1184 = vadd.f32 %v1055, %v1183
    %1185 = vmatmul.bf16.gmra.mxu0 %v733
    %v1186 = vpop.f32.mrf.mxu0
    %v1187 = vadd.f32 %v1058, %v1186
    %v1188 = vpop.f32.mrf.mxu0
    %v1189 = vadd.f32 %v1060, %v1188
    %1190 = vmatmul.bf16.gmra.mxu0 %v736
    %v1191 = vpop.f32.mrf.mxu0
    %v1192 = vadd.f32 %v1063, %v1191
    %v1193 = vpop.f32.mrf.mxu0
    %v1194 = vadd.f32 %v1065, %v1193
    %1195 = vdwg.mxu0
    %1196 = vst [vmem:[#allocation2] sm:$0xff] %v1077
    %1197 = vst [vmem:[#allocation2 + $0x8] sm:$0xff] %v1079
    %1198 = vst [vmem:[#allocation2 + $0x10] sm:$0xff] %v1082
    %1199 = vst [vmem:[#allocation2 + $0x18] sm:$0xff] %v1084
    %1200 = vst [vmem:[#allocation2 + $0x20] sm:$0xff] %v1087
    %1201 = vst [vmem:[#allocation2 + $0x28] sm:$0xff] %v1089
    %1202 = vst [vmem:[#allocation2 + $0x30] sm:$0xff] %v1092
    %1203 = vst [vmem:[#allocation2 + $0x38] sm:$0xff] %v1094
    %1204 = vst [vmem:[#allocation2 + $0x40] sm:$0xff] %v1097
    %1205 = vst [vmem:[#allocation2 + $0x48] sm:$0xff] %v1099
    %1206 = vst [vmem:[#allocation2 + $0x50] sm:$0xff] %v1102
    %1207 = vst [vmem:[#allocation2 + $0x58] sm:$0xff] %v1104
    %1208 = vst [vmem:[#allocation2 + $0x60] sm:$0xff] %v1107
    %1209 = vst [vmem:[#allocation2 + $0x68] sm:$0xff] %v1109
    %1210 = vst [vmem:[#allocation2 + $0x70] sm:$0xff] %v1112
    %1211 = vst [vmem:[#allocation2 + $0x78] sm:$0xff] %v1114
    %1212 = vst [vmem:[#allocation2 + $0x80] sm:$0xff] %v1117
    %1213 = vst [vmem:[#allocation2 + $0x88] sm:$0xff] %v1119
    %1214 = vst [vmem:[#allocation2 + $0x90] sm:$0xff] %v1122
    %1215 = vst [vmem:[#allocation2 + $0x98] sm:$0xff] %v1124
    %1216 = vst [vmem:[#allocation2 + $0xa0] sm:$0xff] %v1127
    %1217 = vst [vmem:[#allocation2 + $0xa8] sm:$0xff] %v1129
    %1218 = vst [vmem:[#allocation2 + $0xb0] sm:$0xff] %v1132
    %1219 = vst [vmem:[#allocation2 + $0xb8] sm:$0xff] %v1134
    %1220 = vst [vmem:[#allocation2 + $0xc0] sm:$0xff] %v1137
    %1221 = vst [vmem:[#allocation2 + $0xc8] sm:$0xff] %v1139
    %1222 = vst [vmem:[#allocation2 + $0xd0] sm:$0xff] %v1142
    %1223 = vst [vmem:[#allocation2 + $0xd8] sm:$0xff] %v1144
    %1224 = vst [vmem:[#allocation2 + $0xe0] sm:$0xff] %v1147
    %1225 = vst [vmem:[#allocation2 + $0xe8] sm:$0xff] %v1149
    %1226 = vst [vmem:[#allocation2 + $0xf0] sm:$0xff] %v1152
    %1227 = vst [vmem:[#allocation2 + $0xf8] sm:$0xff] %v1154
    %1228 = vst [vmem:[#allocation2 + $0x100] sm:$0xff] %v1157
    %1229 = vst [vmem:[#allocation2 + $0x108] sm:$0xff] %v1159
    %1230 = vst [vmem:[#allocation2 + $0x110] sm:$0xff] %v1162
    %1231 = vst [vmem:[#allocation2 + $0x118] sm:$0xff] %v1164
    %1232 = vst [vmem:[#allocation2 + $0x120] sm:$0xff] %v1167
    %1233 = vst [vmem:[#allocation2 + $0x128] sm:$0xff] %v1169
    %1234 = vst [vmem:[#allocation2 + $0x130] sm:$0xff] %v1172
    %1235 = vst [vmem:[#allocation2 + $0x138] sm:$0xff] %v1174
    %1236 = vst [vmem:[#allocation2 + $0x140] sm:$0xff] %v1177
    %1237 = vst [vmem:[#allocation2 + $0x148] sm:$0xff] %v1179
    %1238 = vst [vmem:[#allocation2 + $0x150] sm:$0xff] %v1182
    %1239 = vst [vmem:[#allocation2 + $0x158] sm:$0xff] %v1184
    %1240 = vst [vmem:[#allocation2 + $0x160] sm:$0xff] %v1187
    %1241 = vst [vmem:[#allocation2 + $0x168] sm:$0xff] %v1189
    %1242 = vst [vmem:[#allocation2 + $0x170] sm:$0xff] %v1192
    %1243 = vst [vmem:[#allocation2 + $0x178] sm:$0xff] %v1194
  $region14: #{appnp_net_forward.3} parent=0 // loop_footer
    %s208 = sadd.s32 1, %s204
  $region15: #{appnp_net_forward.3} parent=0 // loop_footer_branch
    %203 = sbr.rel target = $region11
  $region16: #{appnp_net_forward.3} parent=0 // loop_exit
    _
  %v1244 = vld [vmem:[#allocation2] sm:$0xff]
  %v1245 = vld [vmem:[#allocation2 + $0x8] sm:$0xff]
  %v1246 = vld [vmem:[#allocation2 + $0x10] sm:$0xff]
  %v1247 = vld [vmem:[#allocation2 + $0x18] sm:$0xff]
  %v1248 = vld [vmem:[#allocation2 + $0x20] sm:$0xff]
  %v1249 = vld [vmem:[#allocation2 + $0x28] sm:$0xff]
  %v1250 = vld [vmem:[#allocation2 + $0x30] sm:$0xff]
  %v1251 = vld [vmem:[#allocation2 + $0x38] sm:$0xff]
  %v1252 = vld [vmem:[#allocation2 + $0x40] sm:$0xff]
  %v1253 = vld [vmem:[#allocation2 + $0x48] sm:$0xff]
  %v1254 = vld [vmem:[#allocation2 + $0x50] sm:$0xff]
  %v1255 = vld [vmem:[#allocation2 + $0x58] sm:$0xff]
  %v1256 = vld [vmem:[#allocation2 + $0x60] sm:$0xff]
  %v1257 = vld [vmem:[#allocation2 + $0x68] sm:$0xff]
  %v1258 = vld [vmem:[#allocation2 + $0x70] sm:$0xff]
  %v1259 = vld [vmem:[#allocation2 + $0x78] sm:$0xff]
  %v1260 = vld [vmem:[#allocation2 + $0x80] sm:$0xff]
  %v1261 = vld [vmem:[#allocation2 + $0x88] sm:$0xff]
  %v1262 = vld [vmem:[#allocation2 + $0x90] sm:$0xff]
  %v1263 = vld [vmem:[#allocation2 + $0x98] sm:$0xff]
  %v1264 = vld [vmem:[#allocation2 + $0xa0] sm:$0xff]
  %v1265 = vld [vmem:[#allocation2 + $0xa8] sm:$0xff]
  %v1266 = vld [vmem:[#allocation2 + $0xb0] sm:$0xff]
  %v1267 = vld [vmem:[#allocation2 + $0xb8] sm:$0xff]
  %v1268 = vld [vmem:[#allocation2 + $0xc0] sm:$0xff]
  %v1269 = vld [vmem:[#allocation2 + $0xc8] sm:$0xff]
  %v1270 = vld [vmem:[#allocation2 + $0xd0] sm:$0xff]
  %v1271 = vld [vmem:[#allocation2 + $0xd8] sm:$0xff]
  %v1272 = vld [vmem:[#allocation2 + $0xe0] sm:$0xff]
  %v1273 = vld [vmem:[#allocation2 + $0xe8] sm:$0xff]
  %v1274 = vld [vmem:[#allocation2 + $0xf0] sm:$0xff]
  %v1275 = vld [vmem:[#allocation2 + $0xf8] sm:$0xff]
  %v1276 = vld [vmem:[#allocation2 + $0x100] sm:$0xff]
  %v1277 = vld [vmem:[#allocation2 + $0x108] sm:$0xff]
  %v1278 = vld [vmem:[#allocation2 + $0x110] sm:$0xff]
  %v1279 = vld [vmem:[#allocation2 + $0x118] sm:$0xff]
  %v1280 = vld [vmem:[#allocation2 + $0x120] sm:$0xff]
  %v1281 = vld [vmem:[#allocation2 + $0x128] sm:$0xff]
  %v1282 = vld [vmem:[#allocation2 + $0x130] sm:$0xff]
  %v1283 = vld [vmem:[#allocation2 + $0x138] sm:$0xff]
  %v1284 = vld [vmem:[#allocation2 + $0x140] sm:$0xff]
  %v1285 = vld [vmem:[#allocation2 + $0x148] sm:$0xff]
  %v1286 = vld [vmem:[#allocation2 + $0x150] sm:$0xff]
  %v1287 = vld [vmem:[#allocation2 + $0x158] sm:$0xff]
  %v1288 = vld [vmem:[#allocation2 + $0x160] sm:$0xff]
  %v1289 = vld [vmem:[#allocation2 + $0x168] sm:$0xff]
  %v1290 = vld [vmem:[#allocation2 + $0x170] sm:$0xff]
  %v1291 = vld [vmem:[#allocation2 + $0x178] sm:$0xff]
  %v1292 = vlaneseq
  %v1293 = vand.u32 %v1292, 127
  %vm1294 = vcmp.lt.s32.totalorder %v1293, 8
  %v1295 = vsel %vm1294, %v1244, -1e+30
  %v1296 = vsel %vm1294, %v1245, -1e+30
  %v1297 = vsel %vm1294, %v1246, -1e+30
  %v1298 = vsel %vm1294, %v1247, -1e+30
  %v1299 = vsel %vm1294, %v1248, -1e+30
  %v1300 = vsel %vm1294, %v1249, -1e+30
  %v1301 = vsel %vm1294, %v1250, -1e+30
  %v1302 = vsel %vm1294, %v1251, -1e+30
  %v1303 = vsel %vm1294, %v1252, -1e+30
  %v1304 = vsel %vm1294, %v1253, -1e+30
  %v1305 = vsel %vm1294, %v1254, -1e+30
  %v1306 = vsel %vm1294, %v1255, -1e+30
  %v1307 = vsel %vm1294, %v1256, -1e+30
  %v1308 = vsel %vm1294, %v1257, -1e+30
  %v1309 = vsel %vm1294, %v1258, -1e+30
  %v1310 = vsel %vm1294, %v1259, -1e+30
  %v1311 = vsel %vm1294, %v1260, -1e+30
  %v1312 = vsel %vm1294, %v1261, -1e+30
  %v1313 = vsel %vm1294, %v1262, -1e+30
  %v1314 = vsel %vm1294, %v1263, -1e+30
  %v1315 = vsel %vm1294, %v1264, -1e+30
  %v1316 = vsel %vm1294, %v1265, -1e+30
  %v1317 = vsel %vm1294, %v1266, -1e+30
  %v1318 = vsel %vm1294, %v1267, -1e+30
  %v1319 = vsel %vm1294, %v1268, -1e+30
  %v1320 = vsel %vm1294, %v1269, -1e+30
  %v1321 = vsel %vm1294, %v1270, -1e+30
  %v1322 = vsel %vm1294, %v1271, -1e+30
  %v1323 = vsel %vm1294, %v1272, -1e+30
  %v1324 = vsel %vm1294, %v1273, -1e+30
  %v1325 = vsel %vm1294, %v1274, -1e+30
  %v1326 = vsel %vm1294, %v1275, -1e+30
  %v1327 = vsel %vm1294, %v1276, -1e+30
  %v1328 = vsel %vm1294, %v1277, -1e+30
  %v1329 = vsel %vm1294, %v1278, -1e+30
  %v1330 = vsel %vm1294, %v1279, -1e+30
  %v1331 = vsel %vm1294, %v1280, -1e+30
  %v1332 = vsel %vm1294, %v1281, -1e+30
  %v1333 = vsel %vm1294, %v1282, -1e+30
  %v1334 = vsel %vm1294, %v1283, -1e+30
  %v1335 = vsel %vm1294, %v1284, -1e+30
  %v1336 = vsel %vm1294, %v1285, -1e+30
  %v1337 = vsel %vm1294, %v1286, -1e+30
  %v1338 = vsel %vm1294, %v1287, -1e+30
  %v1339 = vsel %vm1294, %v1288, -1e+30
  %v1340 = vsel %vm1294, %v1289, -1e+30
  %v1341 = vsel %vm1294, %v1290, -1e+30
  %v1342 = vsel %vm1294, %v1291, -1e+30
  %1343 = vmax.xlane.f32.xlu0 %v1295
  %v1344 = vpop.xlane.xlu0 %1343
  %1345 = vmax.xlane.f32.xlu0 %v1296
  %v1346 = vpop.xlane.xlu0 %1345
  %1347 = vmax.xlane.f32.xlu0 %v1297
  %v1348 = vpop.xlane.xlu0 %1347
  %1349 = vmax.xlane.f32.xlu0 %v1298
  %v1350 = vpop.xlane.xlu0 %1349
  %1351 = vmax.xlane.f32.xlu0 %v1299
  %v1352 = vpop.xlane.xlu0 %1351
  %1353 = vmax.xlane.f32.xlu0 %v1300
  %v1354 = vpop.xlane.xlu0 %1353
  %1355 = vmax.xlane.f32.xlu0 %v1301
  %v1356 = vpop.xlane.xlu0 %1355
  %1357 = vmax.xlane.f32.xlu0 %v1302
  %v1358 = vpop.xlane.xlu0 %1357
  %1359 = vmax.xlane.f32.xlu0 %v1303
  %v1360 = vpop.xlane.xlu0 %1359
  %1361 = vmax.xlane.f32.xlu0 %v1304
  %v1362 = vpop.xlane.xlu0 %1361
  %1363 = vmax.xlane.f32.xlu0 %v1305
  %v1364 = vpop.xlane.xlu0 %1363
  %1365 = vmax.xlane.f32.xlu0 %v1306
  %v1366 = vpop.xlane.xlu0 %1365
  %1367 = vmax.xlane.f32.xlu0 %v1307
  %v1368 = vpop.xlane.xlu0 %1367
  %1369 = vmax.xlane.f32.xlu0 %v1308
  %v1370 = vpop.xlane.xlu0 %1369
  %1371 = vmax.xlane.f32.xlu0 %v1309
  %v1372 = vpop.xlane.xlu0 %1371
  %1373 = vmax.xlane.f32.xlu0 %v1310
  %v1374 = vpop.xlane.xlu0 %1373
  %1375 = vmax.xlane.f32.xlu0 %v1311
  %v1376 = vpop.xlane.xlu0 %1375
  %1377 = vmax.xlane.f32.xlu0 %v1312
  %v1378 = vpop.xlane.xlu0 %1377
  %1379 = vmax.xlane.f32.xlu0 %v1313
  %v1380 = vpop.xlane.xlu0 %1379
  %1381 = vmax.xlane.f32.xlu0 %v1314
  %v1382 = vpop.xlane.xlu0 %1381
  %1383 = vmax.xlane.f32.xlu0 %v1315
  %v1384 = vpop.xlane.xlu0 %1383
  %1385 = vmax.xlane.f32.xlu0 %v1316
  %v1386 = vpop.xlane.xlu0 %1385
  %1387 = vmax.xlane.f32.xlu0 %v1317
  %v1388 = vpop.xlane.xlu0 %1387
  %1389 = vmax.xlane.f32.xlu0 %v1318
  %v1390 = vpop.xlane.xlu0 %1389
  %1391 = vmax.xlane.f32.xlu0 %v1319
  %v1392 = vpop.xlane.xlu0 %1391
  %1393 = vmax.xlane.f32.xlu0 %v1320
  %v1394 = vpop.xlane.xlu0 %1393
  %1395 = vmax.xlane.f32.xlu0 %v1321
  %v1396 = vpop.xlane.xlu0 %1395
  %1397 = vmax.xlane.f32.xlu0 %v1322
  %v1398 = vpop.xlane.xlu0 %1397
  %1399 = vmax.xlane.f32.xlu0 %v1323
  %v1400 = vpop.xlane.xlu0 %1399
  %1401 = vmax.xlane.f32.xlu0 %v1324
  %v1402 = vpop.xlane.xlu0 %1401
  %1403 = vmax.xlane.f32.xlu0 %v1325
  %v1404 = vpop.xlane.xlu0 %1403
  %1405 = vmax.xlane.f32.xlu0 %v1326
  %v1406 = vpop.xlane.xlu0 %1405
  %1407 = vmax.xlane.f32.xlu0 %v1327
  %v1408 = vpop.xlane.xlu0 %1407
  %1409 = vmax.xlane.f32.xlu0 %v1328
  %v1410 = vpop.xlane.xlu0 %1409
  %1411 = vmax.xlane.f32.xlu0 %v1329
  %v1412 = vpop.xlane.xlu0 %1411
  %1413 = vmax.xlane.f32.xlu0 %v1330
  %v1414 = vpop.xlane.xlu0 %1413
  %1415 = vmax.xlane.f32.xlu0 %v1331
  %v1416 = vpop.xlane.xlu0 %1415
  %1417 = vmax.xlane.f32.xlu0 %v1332
  %v1418 = vpop.xlane.xlu0 %1417
  %1419 = vmax.xlane.f32.xlu0 %v1333
  %v1420 = vpop.xlane.xlu0 %1419
  %1421 = vmax.xlane.f32.xlu0 %v1334
  %v1422 = vpop.xlane.xlu0 %1421
  %1423 = vmax.xlane.f32.xlu0 %v1335
  %v1424 = vpop.xlane.xlu0 %1423
  %1425 = vmax.xlane.f32.xlu0 %v1336
  %v1426 = vpop.xlane.xlu0 %1425
  %1427 = vmax.xlane.f32.xlu0 %v1337
  %v1428 = vpop.xlane.xlu0 %1427
  %1429 = vmax.xlane.f32.xlu0 %v1338
  %v1430 = vpop.xlane.xlu0 %1429
  %1431 = vmax.xlane.f32.xlu0 %v1339
  %v1432 = vpop.xlane.xlu0 %1431
  %1433 = vmax.xlane.f32.xlu0 %v1340
  %v1434 = vpop.xlane.xlu0 %1433
  %1435 = vmax.xlane.f32.xlu0 %v1341
  %v1436 = vpop.xlane.xlu0 %1435
  %1437 = vmax.xlane.f32.xlu0 %v1342
  %v1438 = vpop.xlane.xlu0 %1437
  %v1439 = vsub.f32 %v1295, %v1344
  %v1440 = vsub.f32 %v1296, %v1346
  %v1441 = vsub.f32 %v1297, %v1348
  %v1442 = vsub.f32 %v1298, %v1350
  %v1443 = vsub.f32 %v1299, %v1352
  %v1444 = vsub.f32 %v1300, %v1354
  %v1445 = vsub.f32 %v1301, %v1356
  %v1446 = vsub.f32 %v1302, %v1358
  %v1447 = vsub.f32 %v1303, %v1360
  %v1448 = vsub.f32 %v1304, %v1362
  %v1449 = vsub.f32 %v1305, %v1364
  %v1450 = vsub.f32 %v1306, %v1366
  %v1451 = vsub.f32 %v1307, %v1368
  %v1452 = vsub.f32 %v1308, %v1370
  %v1453 = vsub.f32 %v1309, %v1372
  %v1454 = vsub.f32 %v1310, %v1374
  %v1455 = vsub.f32 %v1311, %v1376
  %v1456 = vsub.f32 %v1312, %v1378
  %v1457 = vsub.f32 %v1313, %v1380
  %v1458 = vsub.f32 %v1314, %v1382
  %v1459 = vsub.f32 %v1315, %v1384
  %v1460 = vsub.f32 %v1316, %v1386
  %v1461 = vsub.f32 %v1317, %v1388
  %v1462 = vsub.f32 %v1318, %v1390
  %v1463 = vsub.f32 %v1319, %v1392
  %v1464 = vsub.f32 %v1320, %v1394
  %v1465 = vsub.f32 %v1321, %v1396
  %v1466 = vsub.f32 %v1322, %v1398
  %v1467 = vsub.f32 %v1323, %v1400
  %v1468 = vsub.f32 %v1324, %v1402
  %v1469 = vsub.f32 %v1325, %v1404
  %v1470 = vsub.f32 %v1326, %v1406
  %v1471 = vsub.f32 %v1327, %v1408
  %v1472 = vsub.f32 %v1328, %v1410
  %v1473 = vsub.f32 %v1329, %v1412
  %v1474 = vsub.f32 %v1330, %v1414
  %v1475 = vsub.f32 %v1331, %v1416
  %v1476 = vsub.f32 %v1332, %v1418
  %v1477 = vsub.f32 %v1333, %v1420
  %v1478 = vsub.f32 %v1334, %v1422
  %v1479 = vsub.f32 %v1335, %v1424
  %v1480 = vsub.f32 %v1336, %v1426
  %v1481 = vsub.f32 %v1337, %v1428
  %v1482 = vsub.f32 %v1338, %v1430
  %v1483 = vsub.f32 %v1339, %v1432
  %v1484 = vsub.f32 %v1340, %v1434
  %v1485 = vsub.f32 %v1341, %v1436
  %v1486 = vsub.f32 %v1342, %v1438
  %v1487 = vmul.f32 %v1439, 1.442695
  %v1488 = vpow.pop %v1487
  %v1489 = vmul.f32 %v1440, 1.442695
  %v1490 = vpow.pop %v1489
  %v1491 = vmul.f32 %v1441, 1.442695
  %v1492 = vpow.pop %v1491
  %v1493 = vmul.f32 %v1442, 1.442695
  %v1494 = vpow.pop %v1493
  %v1495 = vmul.f32 %v1443, 1.442695
  %v1496 = vpow.pop %v1495
  %v1497 = vmul.f32 %v1444, 1.442695
  %v1498 = vpow.pop %v1497
  %v1499 = vmul.f32 %v1445, 1.442695
  %v1500 = vpow.pop %v1499
  %v1501 = vmul.f32 %v1446, 1.442695
  %v1502 = vpow.pop %v1501
  %v1503 = vmul.f32 %v1447, 1.442695
  %v1504 = vpow.pop %v1503
  %v1505 = vmul.f32 %v1448, 1.442695
  %v1506 = vpow.pop %v1505
  %v1507 = vmul.f32 %v1449, 1.442695
  %v1508 = vpow.pop %v1507
  %v1509 = vmul.f32 %v1450, 1.442695
  %v1510 = vpow.pop %v1509
  %v1511 = vmul.f32 %v1451, 1.442695
  %v1512 = vpow.pop %v1511
  %v1513 = vmul.f32 %v1452, 1.442695
  %v1514 = vpow.pop %v1513
  %v1515 = vmul.f32 %v1453, 1.442695
  %v1516 = vpow.pop %v1515
  %v1517 = vmul.f32 %v1454, 1.442695
  %v1518 = vpow.pop %v1517
  %v1519 = vmul.f32 %v1455, 1.442695
  %v1520 = vpow.pop %v1519
  %v1521 = vmul.f32 %v1456, 1.442695
  %v1522 = vpow.pop %v1521
  %v1523 = vmul.f32 %v1457, 1.442695
  %v1524 = vpow.pop %v1523
  %v1525 = vmul.f32 %v1458, 1.442695
  %v1526 = vpow.pop %v1525
  %v1527 = vmul.f32 %v1459, 1.442695
  %v1528 = vpow.pop %v1527
  %v1529 = vmul.f32 %v1460, 1.442695
  %v1530 = vpow.pop %v1529
  %v1531 = vmul.f32 %v1461, 1.442695
  %v1532 = vpow.pop %v1531
  %v1533 = vmul.f32 %v1462, 1.442695
  %v1534 = vpow.pop %v1533
  %v1535 = vmul.f32 %v1463, 1.442695
  %v1536 = vpow.pop %v1535
  %v1537 = vmul.f32 %v1464, 1.442695
  %v1538 = vpow.pop %v1537
  %v1539 = vmul.f32 %v1465, 1.442695
  %v1540 = vpow.pop %v1539
  %v1541 = vmul.f32 %v1466, 1.442695
  %v1542 = vpow.pop %v1541
  %v1543 = vmul.f32 %v1467, 1.442695
  %v1544 = vpow.pop %v1543
  %v1545 = vmul.f32 %v1468, 1.442695
  %v1546 = vpow.pop %v1545
  %v1547 = vmul.f32 %v1469, 1.442695
  %v1548 = vpow.pop %v1547
  %v1549 = vmul.f32 %v1470, 1.442695
  %v1550 = vpow.pop %v1549
  %v1551 = vmul.f32 %v1471, 1.442695
  %v1552 = vpow.pop %v1551
  %v1553 = vmul.f32 %v1472, 1.442695
  %v1554 = vpow.pop %v1553
  %v1555 = vmul.f32 %v1473, 1.442695
  %v1556 = vpow.pop %v1555
  %v1557 = vmul.f32 %v1474, 1.442695
  %v1558 = vpow.pop %v1557
  %v1559 = vmul.f32 %v1475, 1.442695
  %v1560 = vpow.pop %v1559
  %v1561 = vmul.f32 %v1476, 1.442695
  %v1562 = vpow.pop %v1561
  %v1563 = vmul.f32 %v1477, 1.442695
  %v1564 = vpow.pop %v1563
  %v1565 = vmul.f32 %v1478, 1.442695
  %v1566 = vpow.pop %v1565
  %v1567 = vmul.f32 %v1479, 1.442695
  %v1568 = vpow.pop %v1567
  %v1569 = vmul.f32 %v1480, 1.442695
  %v1570 = vpow.pop %v1569
  %v1571 = vmul.f32 %v1481, 1.442695
  %v1572 = vpow.pop %v1571
  %v1573 = vmul.f32 %v1482, 1.442695
  %v1574 = vpow.pop %v1573
  %v1575 = vmul.f32 %v1483, 1.442695
  %v1576 = vpow.pop %v1575
  %v1577 = vmul.f32 %v1484, 1.442695
  %v1578 = vpow.pop %v1577
  %v1579 = vmul.f32 %v1485, 1.442695
  %v1580 = vpow.pop %v1579
  %v1581 = vmul.f32 %v1486, 1.442695
  %v1582 = vpow.pop %v1581
  %v1583 = vsel %vm1294, %v1488, 0.0
  %v1584 = vsel %vm1294, %v1490, 0.0
  %v1585 = vsel %vm1294, %v1492, 0.0
  %v1586 = vsel %vm1294, %v1494, 0.0
  %v1587 = vsel %vm1294, %v1496, 0.0
  %v1588 = vsel %vm1294, %v1498, 0.0
  %v1589 = vsel %vm1294, %v1500, 0.0
  %v1590 = vsel %vm1294, %v1502, 0.0
  %v1591 = vsel %vm1294, %v1504, 0.0
  %v1592 = vsel %vm1294, %v1506, 0.0
  %v1593 = vsel %vm1294, %v1508, 0.0
  %v1594 = vsel %vm1294, %v1510, 0.0
  %v1595 = vsel %vm1294, %v1512, 0.0
  %v1596 = vsel %vm1294, %v1514, 0.0
  %v1597 = vsel %vm1294, %v1516, 0.0
  %v1598 = vsel %vm1294, %v1518, 0.0
  %v1599 = vsel %vm1294, %v1520, 0.0
  %v1600 = vsel %vm1294, %v1522, 0.0
  %v1601 = vsel %vm1294, %v1524, 0.0
  %v1602 = vsel %vm1294, %v1526, 0.0
  %v1603 = vsel %vm1294, %v1528, 0.0
  %v1604 = vsel %vm1294, %v1530, 0.0
  %v1605 = vsel %vm1294, %v1532, 0.0
  %v1606 = vsel %vm1294, %v1534, 0.0
  %v1607 = vsel %vm1294, %v1536, 0.0
  %v1608 = vsel %vm1294, %v1538, 0.0
  %v1609 = vsel %vm1294, %v1540, 0.0
  %v1610 = vsel %vm1294, %v1542, 0.0
  %v1611 = vsel %vm1294, %v1544, 0.0
  %v1612 = vsel %vm1294, %v1546, 0.0
  %v1613 = vsel %vm1294, %v1548, 0.0
  %v1614 = vsel %vm1294, %v1550, 0.0
  %v1615 = vsel %vm1294, %v1552, 0.0
  %v1616 = vsel %vm1294, %v1554, 0.0
  %v1617 = vsel %vm1294, %v1556, 0.0
  %v1618 = vsel %vm1294, %v1558, 0.0
  %v1619 = vsel %vm1294, %v1560, 0.0
  %v1620 = vsel %vm1294, %v1562, 0.0
  %v1621 = vsel %vm1294, %v1564, 0.0
  %v1622 = vsel %vm1294, %v1566, 0.0
  %v1623 = vsel %vm1294, %v1568, 0.0
  %v1624 = vsel %vm1294, %v1570, 0.0
  %v1625 = vsel %vm1294, %v1572, 0.0
  %v1626 = vsel %vm1294, %v1574, 0.0
  %v1627 = vsel %vm1294, %v1576, 0.0
  %v1628 = vsel %vm1294, %v1578, 0.0
  %v1629 = vsel %vm1294, %v1580, 0.0
  %v1630 = vsel %vm1294, %v1582, 0.0
  %1631 = vadd.xlane.f32.xlu0 %v1583
  %v1632 = vpop.xlane.xlu0 %1631
  %1633 = vadd.xlane.f32.xlu0 %v1584
  %v1634 = vpop.xlane.xlu0 %1633
  %1635 = vadd.xlane.f32.xlu0 %v1585
  %v1636 = vpop.xlane.xlu0 %1635
  %1637 = vadd.xlane.f32.xlu0 %v1586
  %v1638 = vpop.xlane.xlu0 %1637
  %1639 = vadd.xlane.f32.xlu0 %v1587
  %v1640 = vpop.xlane.xlu0 %1639
  %1641 = vadd.xlane.f32.xlu0 %v1588
  %v1642 = vpop.xlane.xlu0 %1641
  %1643 = vadd.xlane.f32.xlu0 %v1589
  %v1644 = vpop.xlane.xlu0 %1643
  %1645 = vadd.xlane.f32.xlu0 %v1590
  %v1646 = vpop.xlane.xlu0 %1645
  %1647 = vadd.xlane.f32.xlu0 %v1591
  %v1648 = vpop.xlane.xlu0 %1647
  %1649 = vadd.xlane.f32.xlu0 %v1592
  %v1650 = vpop.xlane.xlu0 %1649
  %1651 = vadd.xlane.f32.xlu0 %v1593
  %v1652 = vpop.xlane.xlu0 %1651
  %1653 = vadd.xlane.f32.xlu0 %v1594
  %v1654 = vpop.xlane.xlu0 %1653
  %1655 = vadd.xlane.f32.xlu0 %v1595
  %v1656 = vpop.xlane.xlu0 %1655
  %1657 = vadd.xlane.f32.xlu0 %v1596
  %v1658 = vpop.xlane.xlu0 %1657
  %1659 = vadd.xlane.f32.xlu0 %v1597
  %v1660 = vpop.xlane.xlu0 %1659
  %1661 = vadd.xlane.f32.xlu0 %v1598
  %v1662 = vpop.xlane.xlu0 %1661
  %1663 = vadd.xlane.f32.xlu0 %v1599
  %v1664 = vpop.xlane.xlu0 %1663
  %1665 = vadd.xlane.f32.xlu0 %v1600
  %v1666 = vpop.xlane.xlu0 %1665
  %1667 = vadd.xlane.f32.xlu0 %v1601
  %v1668 = vpop.xlane.xlu0 %1667
  %1669 = vadd.xlane.f32.xlu0 %v1602
  %v1670 = vpop.xlane.xlu0 %1669
  %1671 = vadd.xlane.f32.xlu0 %v1603
  %v1672 = vpop.xlane.xlu0 %1671
  %1673 = vadd.xlane.f32.xlu0 %v1604
  %v1674 = vpop.xlane.xlu0 %1673
  %1675 = vadd.xlane.f32.xlu0 %v1605
  %v1676 = vpop.xlane.xlu0 %1675
  %1677 = vadd.xlane.f32.xlu0 %v1606
  %v1678 = vpop.xlane.xlu0 %1677
  %1679 = vadd.xlane.f32.xlu0 %v1607
  %v1680 = vpop.xlane.xlu0 %1679
  %1681 = vadd.xlane.f32.xlu0 %v1608
  %v1682 = vpop.xlane.xlu0 %1681
  %1683 = vadd.xlane.f32.xlu0 %v1609
  %v1684 = vpop.xlane.xlu0 %1683
  %1685 = vadd.xlane.f32.xlu0 %v1610
  %v1686 = vpop.xlane.xlu0 %1685
  %1687 = vadd.xlane.f32.xlu0 %v1611
  %v1688 = vpop.xlane.xlu0 %1687
  %1689 = vadd.xlane.f32.xlu0 %v1612
  %v1690 = vpop.xlane.xlu0 %1689
  %1691 = vadd.xlane.f32.xlu0 %v1613
  %v1692 = vpop.xlane.xlu0 %1691
  %1693 = vadd.xlane.f32.xlu0 %v1614
  %v1694 = vpop.xlane.xlu0 %1693
  %1695 = vadd.xlane.f32.xlu0 %v1615
  %v1696 = vpop.xlane.xlu0 %1695
  %1697 = vadd.xlane.f32.xlu0 %v1616
  %v1698 = vpop.xlane.xlu0 %1697
  %1699 = vadd.xlane.f32.xlu0 %v1617
  %v1700 = vpop.xlane.xlu0 %1699
  %1701 = vadd.xlane.f32.xlu0 %v1618
  %v1702 = vpop.xlane.xlu0 %1701
  %1703 = vadd.xlane.f32.xlu0 %v1619
  %v1704 = vpop.xlane.xlu0 %1703
  %1705 = vadd.xlane.f32.xlu0 %v1620
  %v1706 = vpop.xlane.xlu0 %1705
  %1707 = vadd.xlane.f32.xlu0 %v1621
  %v1708 = vpop.xlane.xlu0 %1707
  %1709 = vadd.xlane.f32.xlu0 %v1622
  %v1710 = vpop.xlane.xlu0 %1709
  %1711 = vadd.xlane.f32.xlu0 %v1623
  %v1712 = vpop.xlane.xlu0 %1711
  %1713 = vadd.xlane.f32.xlu0 %v1624
  %v1714 = vpop.xlane.xlu0 %1713
  %1715 = vadd.xlane.f32.xlu0 %v1625
  %v1716 = vpop.xlane.xlu0 %1715
  %1717 = vadd.xlane.f32.xlu0 %v1626
  %v1718 = vpop.xlane.xlu0 %1717
  %1719 = vadd.xlane.f32.xlu0 %v1627
  %v1720 = vpop.xlane.xlu0 %1719
  %1721 = vadd.xlane.f32.xlu0 %v1628
  %v1722 = vpop.xlane.xlu0 %1721
  %1723 = vadd.xlane.f32.xlu0 %v1629
  %v1724 = vpop.xlane.xlu0 %1723
  %1725 = vadd.xlane.f32.xlu0 %v1630
  %v1726 = vpop.xlane.xlu0 %1725
  %v1727 = vlog2.pop %v1632
  %v1728 = vmul.f32 %v1727, 0.6931472
  %v1729 = vlog2.pop %v1634
  %v1730 = vmul.f32 %v1729, 0.6931472
  %v1731 = vlog2.pop %v1636
  %v1732 = vmul.f32 %v1731, 0.6931472
  %v1733 = vlog2.pop %v1638
  %v1734 = vmul.f32 %v1733, 0.6931472
  %v1735 = vlog2.pop %v1640
  %v1736 = vmul.f32 %v1735, 0.6931472
  %v1737 = vlog2.pop %v1642
  %v1738 = vmul.f32 %v1737, 0.6931472
  %v1739 = vlog2.pop %v1644
  %v1740 = vmul.f32 %v1739, 0.6931472
  %v1741 = vlog2.pop %v1646
  %v1742 = vmul.f32 %v1741, 0.6931472
  %v1743 = vlog2.pop %v1648
  %v1744 = vmul.f32 %v1743, 0.6931472
  %v1745 = vlog2.pop %v1650
  %v1746 = vmul.f32 %v1745, 0.6931472
  %v1747 = vlog2.pop %v1652
  %v1748 = vmul.f32 %v1747, 0.6931472
  %v1749 = vlog2.pop %v1654
  %v1750 = vmul.f32 %v1749, 0.6931472
  %v1751 = vlog2.pop %v1656
  %v1752 = vmul.f32 %v1751, 0.6931472
  %v1753 = vlog2.pop %v1658
  %v1754 = vmul.f32 %v1753, 0.6931472
  %v1755 = vlog2.pop %v1660
  %v1756 = vmul.f32 %v1755, 0.6931472
  %v1757 = vlog2.pop %v1662
  %v1758 = vmul.f32 %v1757, 0.6931472
  %v1759 = vlog2.pop %v1664
  %v1760 = vmul.f32 %v1759, 0.6931472
  %v1761 = vlog2.pop %v1666
  %v1762 = vmul.f32 %v1761, 0.6931472
  %v1763 = vlog2.pop %v1668
  %v1764 = vmul.f32 %v1763, 0.6931472
  %v1765 = vlog2.pop %v1670
  %v1766 = vmul.f32 %v1765, 0.6931472
  %v1767 = vlog2.pop %v1672
  %v1768 = vmul.f32 %v1767, 0.6931472
  %v1769 = vlog2.pop %v1674
  %v1770 = vmul.f32 %v1769, 0.6931472
  %v1771 = vlog2.pop %v1676
  %v1772 = vmul.f32 %v1771, 0.6931472
  %v1773 = vlog2.pop %v1678
  %v1774 = vmul.f32 %v1773, 0.6931472
  %v1775 = vlog2.pop %v1680
  %v1776 = vmul.f32 %v1775, 0.6931472
  %v1777 = vlog2.pop %v1682
  %v1778 = vmul.f32 %v1777, 0.6931472
  %v1779 = vlog2.pop %v1684
  %v1780 = vmul.f32 %v1779, 0.6931472
  %v1781 = vlog2.pop %v1686
  %v1782 = vmul.f32 %v1781, 0.6931472
  %v1783 = vlog2.pop %v1688
  %v1784 = vmul.f32 %v1783, 0.6931472
  %v1785 = vlog2.pop %v1690
  %v1786 = vmul.f32 %v1785, 0.6931472
  %v1787 = vlog2.pop %v1692
  %v1788 = vmul.f32 %v1787, 0.6931472
  %v1789 = vlog2.pop %v1694
  %v1790 = vmul.f32 %v1789, 0.6931472
  %v1791 = vlog2.pop %v1696
  %v1792 = vmul.f32 %v1791, 0.6931472
  %v1793 = vlog2.pop %v1698
  %v1794 = vmul.f32 %v1793, 0.6931472
  %v1795 = vlog2.pop %v1700
  %v1796 = vmul.f32 %v1795, 0.6931472
  %v1797 = vlog2.pop %v1702
  %v1798 = vmul.f32 %v1797, 0.6931472
  %v1799 = vlog2.pop %v1704
  %v1800 = vmul.f32 %v1799, 0.6931472
  %v1801 = vlog2.pop %v1706
  %v1802 = vmul.f32 %v1801, 0.6931472
  %v1803 = vlog2.pop %v1708
  %v1804 = vmul.f32 %v1803, 0.6931472
  %v1805 = vlog2.pop %v1710
  %v1806 = vmul.f32 %v1805, 0.6931472
  %v1807 = vlog2.pop %v1712
  %v1808 = vmul.f32 %v1807, 0.6931472
  %v1809 = vlog2.pop %v1714
  %v1810 = vmul.f32 %v1809, 0.6931472
  %v1811 = vlog2.pop %v1716
  %v1812 = vmul.f32 %v1811, 0.6931472
  %v1813 = vlog2.pop %v1718
  %v1814 = vmul.f32 %v1813, 0.6931472
  %v1815 = vlog2.pop %v1720
  %v1816 = vmul.f32 %v1815, 0.6931472
  %v1817 = vlog2.pop %v1722
  %v1818 = vmul.f32 %v1817, 0.6931472
  %v1819 = vlog2.pop %v1724
  %v1820 = vmul.f32 %v1819, 0.6931472
  %v1821 = vlog2.pop %v1726
  %v1822 = vmul.f32 %v1821, 0.6931472
  %v1823 = vsub.f32 %v1439, %v1728
  %v1824 = vsub.f32 %v1440, %v1730
  %v1825 = vsub.f32 %v1441, %v1732
  %v1826 = vsub.f32 %v1442, %v1734
  %v1827 = vsub.f32 %v1443, %v1736
  %v1828 = vsub.f32 %v1444, %v1738
  %v1829 = vsub.f32 %v1445, %v1740
  %v1830 = vsub.f32 %v1446, %v1742
  %v1831 = vsub.f32 %v1447, %v1744
  %v1832 = vsub.f32 %v1448, %v1746
  %v1833 = vsub.f32 %v1449, %v1748
  %v1834 = vsub.f32 %v1450, %v1750
  %v1835 = vsub.f32 %v1451, %v1752
  %v1836 = vsub.f32 %v1452, %v1754
  %v1837 = vsub.f32 %v1453, %v1756
  %v1838 = vsub.f32 %v1454, %v1758
  %v1839 = vsub.f32 %v1455, %v1760
  %v1840 = vsub.f32 %v1456, %v1762
  %v1841 = vsub.f32 %v1457, %v1764
  %v1842 = vsub.f32 %v1458, %v1766
  %v1843 = vsub.f32 %v1459, %v1768
  %v1844 = vsub.f32 %v1460, %v1770
  %v1845 = vsub.f32 %v1461, %v1772
  %v1846 = vsub.f32 %v1462, %v1774
  %v1847 = vsub.f32 %v1463, %v1776
  %v1848 = vsub.f32 %v1464, %v1778
  %v1849 = vsub.f32 %v1465, %v1780
  %v1850 = vsub.f32 %v1466, %v1782
  %v1851 = vsub.f32 %v1467, %v1784
  %v1852 = vsub.f32 %v1468, %v1786
  %v1853 = vsub.f32 %v1469, %v1788
  %v1854 = vsub.f32 %v1470, %v1790
  %v1855 = vsub.f32 %v1471, %v1792
  %v1856 = vsub.f32 %v1472, %v1794
  %v1857 = vsub.f32 %v1473, %v1796
  %v1858 = vsub.f32 %v1474, %v1798
  %v1859 = vsub.f32 %v1475, %v1800
  %v1860 = vsub.f32 %v1476, %v1802
  %v1861 = vsub.f32 %v1477, %v1804
  %v1862 = vsub.f32 %v1478, %v1806
  %v1863 = vsub.f32 %v1479, %v1808
  %v1864 = vsub.f32 %v1480, %v1810
  %v1865 = vsub.f32 %v1481, %v1812
  %v1866 = vsub.f32 %v1482, %v1814
  %v1867 = vsub.f32 %v1483, %v1816
  %v1868 = vsub.f32 %v1484, %v1818
  %v1869 = vsub.f32 %v1485, %v1820
  %v1870 = vsub.f32 %v1486, %v1822
  %v1871 = vsel %vm1294, %v1823, 0.0
  %v1872 = vsel %vm1294, %v1824, 0.0
  %v1873 = vsel %vm1294, %v1825, 0.0
  %v1874 = vsel %vm1294, %v1826, 0.0
  %v1875 = vsel %vm1294, %v1827, 0.0
  %v1876 = vsel %vm1294, %v1828, 0.0
  %v1877 = vsel %vm1294, %v1829, 0.0
  %v1878 = vsel %vm1294, %v1830, 0.0
  %v1879 = vsel %vm1294, %v1831, 0.0
  %v1880 = vsel %vm1294, %v1832, 0.0
  %v1881 = vsel %vm1294, %v1833, 0.0
  %v1882 = vsel %vm1294, %v1834, 0.0
  %v1883 = vsel %vm1294, %v1835, 0.0
  %v1884 = vsel %vm1294, %v1836, 0.0
  %v1885 = vsel %vm1294, %v1837, 0.0
  %v1886 = vsel %vm1294, %v1838, 0.0
  %v1887 = vsel %vm1294, %v1839, 0.0
  %v1888 = vsel %vm1294, %v1840, 0.0
  %v1889 = vsel %vm1294, %v1841, 0.0
  %v1890 = vsel %vm1294, %v1842, 0.0
  %v1891 = vsel %vm1294, %v1843, 0.0
  %v1892 = vsel %vm1294, %v1844, 0.0
  %v1893 = vsel %vm1294, %v1845, 0.0
  %v1894 = vsel %vm1294, %v1846, 0.0
  %v1895 = vsel %vm1294, %v1847, 0.0
  %v1896 = vsel %vm1294, %v1848, 0.0
  %v1897 = vsel %vm1294, %v1849, 0.0
  %v1898 = vsel %vm1294, %v1850, 0.0
  %v1899 = vsel %vm1294, %v1851, 0.0
  %v1900 = vsel %vm1294, %v1852, 0.0
  %v1901 = vsel %vm1294, %v1853, 0.0
  %v1902 = vsel %vm1294, %v1854, 0.0
  %v1903 = vsel %vm1294, %v1855, 0.0
  %v1904 = vsel %vm1294, %v1856, 0.0
  %v1905 = vsel %vm1294, %v1857, 0.0
  %v1906 = vsel %vm1294, %v1858, 0.0
  %v1907 = vsel %vm1294, %v1859, 0.0
  %v1908 = vsel %vm1294, %v1860, 0.0
  %v1909 = vsel %vm1294, %v1861, 0.0
  %v1910 = vsel %vm1294, %v1862, 0.0
  %v1911 = vsel %vm1294, %v1863, 0.0
  %v1912 = vsel %vm1294, %v1864, 0.0
  %v1913 = vsel %vm1294, %v1865, 0.0
  %v1914 = vsel %vm1294, %v1866, 0.0
  %v1915 = vsel %vm1294, %v1867, 0.0
  %v1916 = vsel %vm1294, %v1868, 0.0
  %v1917 = vsel %vm1294, %v1869, 0.0
  %v1918 = vsel %vm1294, %v1870, 0.0
  %1919 = vst [vmem:[%s2] sm:$0xff] %v1871
  %1920 = vst [vmem:[%s2 + $0x8] sm:$0xff] %v1872
  %1921 = vst [vmem:[%s2 + $0x10] sm:$0xff] %v1873
  %1922 = vst [vmem:[%s2 + $0x18] sm:$0xff] %v1874
  %1923 = vst [vmem:[%s2 + $0x20] sm:$0xff] %v1875
  %1924 = vst [vmem:[%s2 + $0x28] sm:$0xff] %v1876
  %1925 = vst [vmem:[%s2 + $0x30] sm:$0xff] %v1877
  %1926 = vst [vmem:[%s2 + $0x38] sm:$0xff] %v1878
  %1927 = vst [vmem:[%s2 + $0x40] sm:$0xff] %v1879
  %1928 = vst [vmem:[%s2 + $0x48] sm:$0xff] %v1880
  %1929 = vst [vmem:[%s2 + $0x50] sm:$0xff] %v1881
  %1930 = vst [vmem:[%s2 + $0x58] sm:$0xff] %v1882
  %1931 = vst [vmem:[%s2 + $0x60] sm:$0xff] %v1883
  %1932 = vst [vmem:[%s2 + $0x68] sm:$0xff] %v1884
  %1933 = vst [vmem:[%s2 + $0x70] sm:$0xff] %v1885
  %1934 = vst [vmem:[%s2 + $0x78] sm:$0xff] %v1886
  %1935 = vst [vmem:[%s2 + $0x80] sm:$0xff] %v1887
  %1936 = vst [vmem:[%s2 + $0x88] sm:$0xff] %v1888
  %1937 = vst [vmem:[%s2 + $0x90] sm:$0xff] %v1889
  %1938 = vst [vmem:[%s2 + $0x98] sm:$0xff] %v1890
  %1939 = vst [vmem:[%s2 + $0xa0] sm:$0xff] %v1891
  %1940 = vst [vmem:[%s2 + $0xa8] sm:$0xff] %v1892
  %1941 = vst [vmem:[%s2 + $0xb0] sm:$0xff] %v1893
  %1942 = vst [vmem:[%s2 + $0xb8] sm:$0xff] %v1894
  %1943 = vst [vmem:[%s2 + $0xc0] sm:$0xff] %v1895
  %1944 = vst [vmem:[%s2 + $0xc8] sm:$0xff] %v1896
  %1945 = vst [vmem:[%s2 + $0xd0] sm:$0xff] %v1897
  %1946 = vst [vmem:[%s2 + $0xd8] sm:$0xff] %v1898
  %1947 = vst [vmem:[%s2 + $0xe0] sm:$0xff] %v1899
  %1948 = vst [vmem:[%s2 + $0xe8] sm:$0xff] %v1900
  %1949 = vst [vmem:[%s2 + $0xf0] sm:$0xff] %v1901
  %1950 = vst [vmem:[%s2 + $0xf8] sm:$0xff] %v1902
  %1951 = vst [vmem:[%s2 + $0x100] sm:$0xff] %v1903
  %1952 = vst [vmem:[%s2 + $0x108] sm:$0xff] %v1904
  %1953 = vst [vmem:[%s2 + $0x110] sm:$0xff] %v1905
  %1954 = vst [vmem:[%s2 + $0x118] sm:$0xff] %v1906
  %1955 = vst [vmem:[%s2 + $0x120] sm:$0xff] %v1907
  %1956 = vst [vmem:[%s2 + $0x128] sm:$0xff] %v1908
  %1957 = vst [vmem:[%s2 + $0x130] sm:$0xff] %v1909
  %1958 = vst [vmem:[%s2 + $0x138] sm:$0xff] %v1910
  %1959 = vst [vmem:[%s2 + $0x140] sm:$0xff] %v1911
  %1960 = vst [vmem:[%s2 + $0x148] sm:$0xff] %v1912
  %1961 = vst [vmem:[%s2 + $0x150] sm:$0xff] %v1913
  %1962 = vst [vmem:[%s2 + $0x158] sm:$0xff] %v1914
  %1963 = vst [vmem:[%s2 + $0x160] sm:$0xff] %v1915
  %1964 = vst [vmem:[%s2 + $0x168] sm:$0xff] %v1916
  %1965 = vst [vmem:[%s2 + $0x170] sm:$0xff] %v1917
  %1966 = vst [vmem:[%s2 + $0x178] sm:$0xff] %v1918
  // Predicated region
  $region17: #{appnp_net_forward.3} parent=0 // pred_check
    _
  $region18: #{appnp_net_forward.3} parent=0 // pred_check_branch
    %1968 = sbr.rel (0) target = $region20
  $region19: #{appnp_net_forward.3} parent=0 // pred_region
    _
  $region20: #{appnp_net_forward.3} parent=0 // pred_fallthru
    _
  // Predicated region
  $region21: #{appnp_net_forward.3} parent=0 // pred_check
    _
  $region22: #{appnp_net_forward.3} parent=0 // pred_check_branch
    %1970 = sbr.rel (0) target = $region24
  $region23: #{appnp_net_forward.3} parent=0 // pred_region
    _
  $region24: #{appnp_net_forward.3} parent=0 // pred_fallthru
    _

</llo_original>
